<compile_context>
chip_gen: v5e
topology: v5e:2x2
jax: 0.10.0
libtpu: 0.0.40
codegen_flags: <defaults>
</compile_context>

<pallas_src>
import functools

import jax
import jax.numpy as jnp
from jax import lax
from jax.experimental import pallas as pl
from jax.experimental.pallas import tpu as pltpu

_EPS_CDIST = 1e-8      # cdist2 eps
_EPS_NORM_SQ = 1e-24   # (F.normalize eps=1e-12)^2, used under rsqrt
_EPS_COS = 1e-8        # nn.CosineSimilarity eps


# ----------------------------- kernel ------------------------------------------
def _loss_kernel(t_ref, s_ref, out_ref,
                 t_sq_sc, s_sq_sc, g2t_sc, g2s_sc, acc_sc, *, ts):
    c = pl.program_id(1)
    n_chunks = pl.num_programs(1)
    B, S, D = t_ref.shape

    # ---- per-layer init (first chunk): key-side token sq-norms + accumulators ----
    @pl.when(c == 0)
    def _init():
        t_full = t_ref[...].astype(jnp.float32)
        s_full = s_ref[...].astype(jnp.float32)
        t_sq_sc[...] = jnp.sum(t_full * t_full, axis=-1)        # (B, S)
        s_sq_sc[...] = jnp.sum(s_full * s_full, axis=-1)
        g2t_sc[...] = jnp.zeros_like(g2t_sc)
        g2s_sc[...] = jnp.zeros_like(g2s_sc)
        acc_sc[...] = jnp.zeros_like(acc_sc)

    # ---- this chunk's query rows (TS tokens) ----
    q0 = c * ts
    if ts % 8 == 0:
        q0 = pl.multiple_of(q0, 8)                              # sublane-aligned slice
    t_q = t_ref[:, pl.ds(q0, ts), :].astype(jnp.float32)        # (B, TS, D)
    s_q = s_ref[:, pl.ds(q0, ts), :].astype(jnp.float32)
    t_sq_q = jnp.sum(t_q * t_q, axis=-1)                        # (B, TS)
    s_sq_q = jnp.sum(s_q * s_q, axis=-1)
    t_sq_k = t_sq_sc[...]                                       # (B, S)
    s_sq_k = s_sq_sc[...]

    # ---------------- Internal_loss: (B,TS,S) Gram chunk on the MXU ----------------
    # bf16 operands, f32 accumulation; one Gram per tensor reused by both terms.
    dn = (((2,), (2,)), ((0,), (0,)))                           # batched over B
    t_k_bf = t_ref[...].astype(jnp.bfloat16)
    s_k_bf = s_ref[...].astype(jnp.bfloat16)
    g_t = lax.dot_general(t_q.astype(jnp.bfloat16), t_k_bf, dn,
                          preferred_element_type=jnp.float32)   # (B, TS, S)
    g_s = lax.dot_general(s_q.astype(jnp.bfloat16), s_k_bf, dn,
                          preferred_element_type=jnp.float32)

    row_g = q0 + lax.broadcasted_iota(jnp.int32, (ts, S), 0)    # global token index
    col_g = lax.broadcasted_iota(jnp.int32, (ts, S), 1)
    off_diag = (row_g != col_g)[None, :, :]                     # (1, TS, S)

    # Distance term first (its slabs die before the cosine slabs are built).
    # Diagonal masked once on the difference: both sides are sqrt(eps) analytically,
    # so their contribution is exactly 0 (and the bf16-Gram diag error cannot leak).
    d_t = jnp.sqrt(jnp.maximum(
        t_sq_q[:, :, None] + t_sq_k[:, None, :] - 2.0 * g_t, 0.0) + _EPS_CDIST)
    d_s = jnp.sqrt(jnp.maximum(
        s_sq_q[:, :, None] + s_sq_k[:, None, :] - 2.0 * g_s, 0.0) + _EPS_CDIST)
    d_diff = jnp.where(off_diag, d_t - d_s, 0.0)
    int_d_p = jnp.sum(d_diff * d_diff)

    # Cosine term: Gram scaled by outer product of clamped inverse norms (rsqrt/EUP).
    inv_t_q = lax.rsqrt(jnp.maximum(t_sq_q, _EPS_NORM_SQ))
    inv_t_k = lax.rsqrt(jnp.maximum(t_sq_k, _EPS_NORM_SQ))
    inv_s_q = lax.rsqrt(jnp.maximum(s_sq_q, _EPS_NORM_SQ))
    inv_s_k = lax.rsqrt(jnp.maximum(s_sq_k, _EPS_NORM_SQ))
    c_diff = jnp.where(
        off_diag,
        g_t * inv_t_q[:, :, None] * inv_t_k[:, None, :]
        - g_s * inv_s_q[:, :, None] * inv_s_k[:, None, :],
        0.0)
    int_c_p = jnp.sum(c_diff * c_diff)

    # ---------------- External_1D (centroid) partial sums --------------------------
    dq = t_q - s_q
    cen_d_p = jnp.sum(dq * dq)
    dot_p = jnp.sum(t_q * s_q)

    # ---------------- External_2D: cross-batch Gram partial (exact f32, VPU) -------
    # Kept on the VPU: at small B the MXU would stream S*D/256 nearly-empty passes
    # and double the MXU-bound time, while these B^2*TS*D MACs overlap under the MXU.
    col_bb = lax.broadcasted_iota(jnp.int32, (B, B), 1)
    g2t_c = jnp.zeros((B, B), jnp.float32)
    g2s_c = jnp.zeros((B, B), jnp.float32)
    for i in range(B):                                          # B is static & small
        vt = jnp.sum(jnp.sum(t_q * t_q[i], axis=-1), axis=-1, keepdims=True)  # (B,1)
        vs = jnp.sum(jnp.sum(s_q * s_q[i], axis=-1), axis=-1, keepdims=True)
        g2t_c = jnp.where(col_bb == i, vt, g2t_c)
        g2s_c = jnp.where(col_bb == i, vs, g2s_c)
    g2t_sc[...] += g2t_c
    g2s_sc[...] += g2s_c

    # ---------------- accumulate the 4 scalar partials in a lane-dense tile --------
    r8 = lax.broadcasted_iota(jnp.int32, (8, 128), 0)
    c128 = lax.broadcasted_iota(jnp.int32, (8, 128), 1)
    contrib = jnp.zeros((8, 128), jnp.float32)
    for k, v in enumerate((int_d_p, int_c_p, cen_d_p, dot_p)):
        contrib = jnp.where((r8 == 0) & (c128 == k), v, contrib)
    acc_sc[...] += contrib

    # ---------------- finalize on the last chunk of this layer ---------------------
    @pl.when(c == n_chunks - 1)
    def _finalize():
        acc = acc_sc[...]

        def _slot(k):
            return jnp.sum(jnp.where((r8 == 0) & (c128 == k), acc, 0.0))

        int_d_sum = _slot(0)
        int_c_sum = _slot(1)
        cen_d_sum = _slot(2)
        dot_sum = _slot(3)

        internal_distance = int_d_sum / jnp.float32(B * S * S)
        internal_cosine = int_c_sum / jnp.float32(B * S * S)
        centroid_distance = cen_d_sum / jnp.float32(B * S * D)
        nt2 = jnp.sum(t_sq_sc[...])
        ns2 = jnp.sum(s_sq_sc[...])
        cosim = dot_sum / jnp.maximum(jnp.sqrt(nt2) * jnp.sqrt(ns2), _EPS_COS)
        centroid_cosine = -jnp.log(jnp.abs(cosim))

        g2t = g2t_sc[...]                                       # (B, B) exact f32
        g2s = g2s_sc[...]
        eye_bb = (lax.broadcasted_iota(jnp.int32, (B, B), 0)
                  == lax.broadcasted_iota(jnp.int32, (B, B), 1))
        # Row / column views of the Gram diagonal (flattened-row squared norms),
        # extracted by masked reduction (no transpose needed).
        tf_r = jnp.sum(jnp.where(eye_bb, g2t, 0.0), axis=1, keepdims=True)   # (B,1)
        tf_c = jnp.sum(jnp.where(eye_bb, g2t, 0.0), axis=0, keepdims=True)   # (1,B)
        sf_r = jnp.sum(jnp.where(eye_bb, g2s, 0.0), axis=1, keepdims=True)
        sf_c = jnp.sum(jnp.where(eye_bb, g2s, 0.0), axis=0, keepdims=True)

        d2t = jnp.sqrt(jnp.maximum(tf_r + tf_c - 2.0 * g2t, 0.0) + _EPS_CDIST)
        d2s = jnp.sqrt(jnp.maximum(sf_r + sf_c - 2.0 * g2s, 0.0) + _EPS_CDIST)
        e_d = jnp.where(eye_bb, 0.0, d2t - d2s)                 # diag contributes 0
        external_distance = jnp.sum(e_d * e_d) / jnp.float32(B * B)

        c2t = (g2t * lax.rsqrt(jnp.maximum(tf_r, _EPS_NORM_SQ))
                   * lax.rsqrt(jnp.maximum(tf_c, _EPS_NORM_SQ)))
        c2s = (g2s * lax.rsqrt(jnp.maximum(sf_r, _EPS_NORM_SQ))
                   * lax.rsqrt(jnp.maximum(sf_c, _EPS_NORM_SQ)))
        e_c = jnp.where(eye_bb, 0.0, c2t - c2s)                 # diag is exactly 1-1
        external_cosine = jnp.sum(e_c * e_c) / jnp.float32(B * B)

        tile = jnp.zeros((8, 128), jnp.float32)
        for k, v in enumerate((internal_distance, internal_cosine, centroid_distance,
                               centroid_cosine, external_distance, external_cosine)):
            tile = jnp.where((r8 == 0) & (c128 == k), v, tile)
        out_ref[...] = tile


# ----------------------------- wrapper ------------------------------------------
def _is_v5():
    try:
        return "v5" in jax.devices()[0].device_kind.lower()
    except Exception:
        return False


def _vmem_limit_bytes():
    """Generation-aware scoped-VMEM limit (review: raise on 128 MiB parts)."""
    cap = 0
    try:
        info = pltpu.get_tpu_info()
        for name in ("vmem_capacity_bytes", "vmem_bytes", "vmem_size_bytes"):
            v = getattr(info, name, None)
            if v:
                cap = int(v)
                break
    except Exception:
        cap = 0
    if cap <= 0:
        # Conservative fallback: v7x per-TensorCore VMEM (works on all generations).
        cap = 64 * 1024 * 1024
    return max(32 * 1024 * 1024, min(int(cap * 0.85), 110 * 1024 * 1024))


def _pick_chunk(b, s, d, vmem_limit):
    """Largest S-chunk (divides S, multiple of 8, <= MXU-native width) whose per-chunk
    (B,TS,S)/(B,TS,D) slabs fit in the VMEM left after the double-buffered inputs."""
    pref = 128 if _is_v5() else 256                 # v5e MXU is 128-wide
    input_bytes = 2 * 2 * b * s * d * 4             # two f32 inputs, double-buffered
    budget = max(vmem_limit - input_bytes - (4 << 20), 1 << 20)
    choice = None
    for ts in (8, 16, 32, 64, 128, 256):
        if ts > s or s % ts != 0 or ts > pref:
            continue
        need = 6 * b * ts * s * 4 + 4 * b * ts * d * 4
        if choice is None or need <= budget:
            choice = ts
    return choice if choice is not None else s


def all_structure_loss_pallas(teacher_fms, student_fms):
    """teacher_fms / student_fms: (L, B, S, D) stacked layer pairs.

    Returns the 6-tuple (internal_distance, internal_cosine, centroid_distance,
    centroid_cosine, external_distance, external_cosine), each averaged over L.
    """
    teacher_fms = jnp.asarray(teacher_fms, jnp.float32)
    student_fms = jnp.asarray(student_fms, jnp.float32)
    L, B, S, D = teacher_fms.shape

    vmem_limit = _vmem_limit_bytes()
    ts = _pick_chunk(B, S, D, vmem_limit)
    n_chunks = S // ts

    kernel = functools.partial(_loss_kernel, ts=ts)
    out = pl.pallas_call(
        kernel,
        out_shape=jax.ShapeDtypeStruct((L, 8, 128), jnp.float32),
        grid_spec=pltpu.PrefetchScalarGridSpec(
            num_scalar_prefetch=0,
            grid=(L, n_chunks),                       # reduction (chunk) axis last
            in_specs=[
                pl.BlockSpec((None, B, S, D), lambda i, c: (i, 0, 0, 0)),
                pl.BlockSpec((None, B, S, D), lambda i, c: (i, 0, 0, 0)),
            ],
            out_specs=pl.BlockSpec((None, 8, 128), lambda i, c: (i, 0, 0)),
            scratch_shapes=[
                pltpu.VMEM((B, S), jnp.float32),      # teacher per-token sq norms
                pltpu.VMEM((B, S), jnp.float32),      # student per-token sq norms
                pltpu.VMEM((B, B), jnp.float32),      # teacher cross-batch Gram
                pltpu.VMEM((B, B), jnp.float32),      # student cross-batch Gram
                pltpu.VMEM((8, 128), jnp.float32),    # scalar partial-sum slots
            ],
        ),
        compiler_params=pltpu.CompilerParams(
            dimension_semantics=("parallel", "arbitrary"),
            vmem_limit_bytes=vmem_limit,
        ),
    )(teacher_fms, student_fms)

    per_layer = out[:, 0, :6]                         # (L, 6)
    losses = jnp.sum(per_layer, axis=0) / jnp.float32(L)
    return tuple(losses[k] for k in range(6))


# -------------------------- pure-JAX reference (for checking) -------------------
def _cdist2_ref(x, y, eps=1e-8):
    x_sq = jnp.sum(x ** 2, axis=-1, keepdims=True)
    y_sq = jnp.sum(y ** 2, axis=-1)
    xy = jnp.matmul(x, jnp.swapaxes(y, -1, -2))
    sq = x_sq + y_sq[..., None, :] - 2.0 * xy
    return jnp.sqrt(jnp.maximum(sq, 0.0) + eps)


def _normalize_ref(x):
    n = jnp.sqrt(jnp.sum(x ** 2, axis=-1, keepdims=True))
    return x / jnp.maximum(n, 1e-12)


def _reference(t_fms, s_fms):
    L = t_fms.shape[0]
    int_d = int_c = cen_d = cen_c = ext_d = ext_c = 0.0
    for i in range(L):
        t, s = t_fms[i], s_fms[i]
        te, se = _cdist2_ref(t, t), _cdist2_ref(s, s)
        int_d += jnp.mean((te - se) ** 2)
        tn, sn = _normalize_ref(t), _normalize_ref(s)
        tc = jnp.matmul(tn, jnp.swapaxes(tn, -1, -2))
        sc = jnp.matmul(sn, jnp.swapaxes(sn, -1, -2))
        int_c += jnp.mean((tc - sc) ** 2)
        cen_d += jnp.mean((t - s) ** 2)
        tfl, sfl = t.reshape(-1), s.reshape(-1)
        cos = jnp.dot(tfl, sfl) / jnp.maximum(
            jnp.linalg.norm(tfl) * jnp.linalg.norm(sfl), 1e-8)
        cen_c += -jnp.log(jnp.abs(cos))
        t2, s2 = t.reshape(t.shape[0], -1), s.reshape(s.shape[0], -1)
        te2, se2 = _cdist2_ref(t2, t2), _cdist2_ref(s2, s2)
        ext_d += jnp.mean((te2 - se2) ** 2)
        tn2, sn2 = _normalize_ref(t2), _normalize_ref(s2)
        ext_c += jnp.mean((tn2 @ tn2.T - sn2 @ sn2.T) ** 2)
    return tuple(x / L for x in (int_d, int_c, cen_d, cen_c, ext_d, ext_c))


if __name__ == "__main__":
    key = jax.random.PRNGKey(0)
    B, S, D, L = 2, 8, 32, 2            # batch, seq, hidden, number of layer pairs
    n_teacher_layers = 2 * L + 1        # teacher[3] indexed up to 2*L
    n_student_layers = L + 1            # student[3] indexed up to L
    keys = jax.random.split(key, n_teacher_layers + n_student_layers)

    teacher_hidden = [jax.random.normal(keys[i], (B, S, D), jnp.float32)
                      for i in range(n_teacher_layers)]
    student_hidden = [jax.random.normal(keys[n_teacher_layers + i], (B, S, D), jnp.float32)
                      for i in range(n_student_layers)]
    # Mimic the HF-style output tuples where index 3 holds hidden states.
    teacher = (None, None, None, teacher_hidden)
    student = (None, None, None, student_hidden)

    # Glue: gather exactly the layer pairs the PyTorch module consumes.
    t_fms = jnp.stack([teacher[3][2 * (i + 1)] for i in range(L)])  # (L, B, S, D)
    s_fms = jnp.stack([student[3][i + 1] for i in range(L)])        # (L, B, S, D)

    losses = all_structure_loss_pallas(t_fms, s_fms)
    losses = jax.block_until_ready(losses)

    ref = _reference(t_fms, s_fms)
    # 5e-3 relative tolerance: the internal Grams use bf16 MXU operands (f32 accum,
    # diagonals masked on the difference); everything else is exact f32.
    for got, want in zip(losses, ref):
        g, w = float(got), float(want)
        assert abs(g - w) <= 5e-3 * max(1.0, abs(w)), (g, w)

    print("KERNEL_OK")
</pallas_src>

<mosaic_0001>
module attributes {stable_mosaic.version = 11 : i64} {
  func.func @_loss_kernel(%arg0: i32, %arg1: i32, %arg2: memref<1x2x8x32xf32, #tpu.memory_space<vmem>>, %arg3: memref<1x2x8x32xf32, #tpu.memory_space<vmem>>, %arg4: memref<1x8x128xf32, #tpu.memory_space<vmem>>, %arg5: memref<2x8xf32, #tpu.memory_space<vmem>>, %arg6: memref<2x8xf32, #tpu.memory_space<vmem>>, %arg7: memref<2x2xf32, #tpu.memory_space<vmem>>, %arg8: memref<2x2xf32, #tpu.memory_space<vmem>>, %arg9: memref<8x128xf32, #tpu.memory_space<vmem>>) attributes {dimension_semantics = [#tpu.dimension_semantics<parallel>, #tpu.dimension_semantics<arbitrary>], iteration_bounds = array<i64: 2, 1>, scalar_prefetch = 0 : i64, scratch_operands = 5 : i64, tpu.core_type = #tpu.core_type<tc>, window_params = [{transform_indices = @transform_0, window_bounds = array<i64: 1, 2, 8, 32>}, {transform_indices = @transform_1, window_bounds = array<i64: 1, 2, 8, 32>}, {transform_indices = @transform_2, window_bounds = array<i64: 1, 8, 128>}]} {
    %c0_i32 = arith.constant 0 : i32
    %0 = arith.cmpi eq, %arg1, %c0_i32 : i32
    %1 = arith.extui %0 : i1 to i32
    %c0_i32_0 = arith.constant 0 : i32
    %2 = arith.cmpi ne, %1, %c0_i32_0 : i32
    scf.if %2 {
      %c0_71 = arith.constant 0 : index
      %c0_72 = arith.constant 0 : index
      %c0_73 = arith.constant 0 : index
      %c0_74 = arith.constant 0 : index
      %212 = vector.load %arg2[%c0_71, %c0_72, %c0_73, %c0_74] : memref<1x2x8x32xf32, #tpu.memory_space<vmem>>, vector<1x2x8x32xf32>
      %213 = vector.shape_cast %212 : vector<1x2x8x32xf32> to vector<2x8x32xf32>
      %c0_75 = arith.constant 0 : index
      %c0_76 = arith.constant 0 : index
      %c0_77 = arith.constant 0 : index
      %c0_78 = arith.constant 0 : index
      %214 = vector.load %arg3[%c0_75, %c0_76, %c0_77, %c0_78] : memref<1x2x8x32xf32, #tpu.memory_space<vmem>>, vector<1x2x8x32xf32>
      %215 = vector.shape_cast %214 : vector<1x2x8x32xf32> to vector<2x8x32xf32>
      %216 = arith.mulf %213, %213 : vector<2x8x32xf32>
      %cst_79 = arith.constant dense<0.000000e+00> : vector<2x8xf32>
      %217 = vector.multi_reduction <add>, %216, %cst_79 [2] : vector<2x8x32xf32> to vector<2x8xf32>
      %c0_80 = arith.constant 0 : index
      %c0_81 = arith.constant 0 : index
      %218 = vector.load %arg5[%c0_80, %c0_81] : memref<2x8xf32, #tpu.memory_space<vmem>>, vector<2x8xf32>
      tpu.vector_store %arg5[%c0_80, %c0_81], %217 {strides = array<i32>} : memref<2x8xf32, #tpu.memory_space<vmem>>, vector<2x8xf32>,
      %219 = arith.mulf %215, %215 : vector<2x8x32xf32>
      %cst_82 = arith.constant dense<0.000000e+00> : vector<2x8xf32>
      %220 = vector.multi_reduction <add>, %219, %cst_82 [2] : vector<2x8x32xf32> to vector<2x8xf32>
      %c0_83 = arith.constant 0 : index
      %c0_84 = arith.constant 0 : index
      %221 = vector.load %arg6[%c0_83, %c0_84] : memref<2x8xf32, #tpu.memory_space<vmem>>, vector<2x8xf32>
      tpu.vector_store %arg6[%c0_83, %c0_84], %220 {strides = array<i32>} : memref<2x8xf32, #tpu.memory_space<vmem>>, vector<2x8xf32>,
      %cst_85 = arith.constant 0.000000e+00 : f32
      %222 = vector.broadcast %cst_85 : f32 to vector<2x2xf32>
      %c0_86 = arith.constant 0 : index
      %c0_87 = arith.constant 0 : index
      %223 = vector.load %arg7[%c0_86, %c0_87] : memref<2x2xf32, #tpu.memory_space<vmem>>, vector<2x2xf32>
      tpu.vector_store %arg7[%c0_86, %c0_87], %222 {strides = array<i32>} : memref<2x2xf32, #tpu.memory_space<vmem>>, vector<2x2xf32>,
      %cst_88 = arith.constant 0.000000e+00 : f32
      %224 = vector.broadcast %cst_88 : f32 to vector<2x2xf32>
      %c0_89 = arith.constant 0 : index
      %c0_90 = arith.constant 0 : index
      %225 = vector.load %arg8[%c0_89, %c0_90] : memref<2x2xf32, #tpu.memory_space<vmem>>, vector<2x2xf32>
      tpu.vector_store %arg8[%c0_89, %c0_90], %224 {strides = array<i32>} : memref<2x2xf32, #tpu.memory_space<vmem>>, vector<2x2xf32>,
      %cst_91 = arith.constant 0.000000e+00 : f32
      %226 = vector.broadcast %cst_91 : f32 to vector<8x128xf32>
      %c0_92 = arith.constant 0 : index
      %c0_93 = arith.constant 0 : index
      %227 = vector.load %arg9[%c0_92, %c0_93] : memref<8x128xf32, #tpu.memory_space<vmem>>, vector<8x128xf32>
      tpu.vector_store %arg9[%c0_92, %c0_93], %226 {strides = array<i32>} : memref<8x128xf32, #tpu.memory_space<vmem>>, vector<8x128xf32>,
    } else {
    }
    %c8_i32 = arith.constant 8 : i32
    %3 = arith.muli %arg1, %c8_i32 : i32
    %4 = tpu.assume_multiple %3, 8 : i32
    %c0 = arith.constant 0 : index
    %c0_1 = arith.constant 0 : index
    %5 = arith.index_cast %4 : i32 to index
    %c0_2 = arith.constant 0 : index
    %6 = vector.load %arg2[%c0, %c0_1, %5, %c0_2] : memref<1x2x8x32xf32, #tpu.memory_space<vmem>>, vector<1x2x8x32xf32>
    %7 = vector.shape_cast %6 : vector<1x2x8x32xf32> to vector<2x8x32xf32>
    %c0_3 = arith.constant 0 : index
    %c0_4 = arith.constant 0 : index
    %8 = arith.index_cast %4 : i32 to index
    %c0_5 = arith.constant 0 : index
    %9 = vector.load %arg3[%c0_3, %c0_4, %8, %c0_5] : memref<1x2x8x32xf32, #tpu.memory_space<vmem>>, vector<1x2x8x32xf32>
    %10 = vector.shape_cast %9 : vector<1x2x8x32xf32> to vector<2x8x32xf32>
    %11 = arith.mulf %7, %7 : vector<2x8x32xf32>
    %cst = arith.constant dense<0.000000e+00> : vector<2x8xf32>
    %12 = vector.multi_reduction <add>, %11, %cst [2] : vector<2x8x32xf32> to vector<2x8xf32>
    %13 = arith.mulf %10, %10 : vector<2x8x32xf32>
    %cst_6 = arith.constant dense<0.000000e+00> : vector<2x8xf32>
    %14 = vector.multi_reduction <add>, %13, %cst_6 [2] : vector<2x8x32xf32> to vector<2x8xf32>
    %c0_7 = arith.constant 0 : index
    %c0_8 = arith.constant 0 : index
    %15 = vector.load %arg5[%c0_7, %c0_8] : memref<2x8xf32, #tpu.memory_space<vmem>>, vector<2x8xf32>
    %c0_9 = arith.constant 0 : index
    %c0_10 = arith.constant 0 : index
    %16 = vector.load %arg6[%c0_9, %c0_10] : memref<2x8xf32, #tpu.memory_space<vmem>>, vector<2x8xf32>
    %c0_11 = arith.constant 0 : index
    %c0_12 = arith.constant 0 : index
    %c0_13 = arith.constant 0 : index
    %c0_14 = arith.constant 0 : index
    %17 = vector.load %arg2[%c0_11, %c0_12, %c0_13, %c0_14] : memref<1x2x8x32xf32, #tpu.memory_space<vmem>>, vector<1x2x8x32xf32>
    %18 = vector.shape_cast %17 : vector<1x2x8x32xf32> to vector<2x8x32xf32>
    %19 = arith.truncf %18 : vector<2x8x32xf32> to vector<2x8x32xbf16>
    %c0_15 = arith.constant 0 : index
    %c0_16 = arith.constant 0 : index
    %c0_17 = arith.constant 0 : index
    %c0_18 = arith.constant 0 : index
    %20 = vector.load %arg3[%c0_15, %c0_16, %c0_17, %c0_18] : memref<1x2x8x32xf32, #tpu.memory_space<vmem>>, vector<1x2x8x32xf32>
    %21 = vector.shape_cast %20 : vector<1x2x8x32xf32> to vector<2x8x32xf32>
    %22 = arith.truncf %21 : vector<2x8x32xf32> to vector<2x8x32xbf16>
    %23 = arith.truncf %7 : vector<2x8x32xf32> to vector<2x8x32xbf16>
    %cst_19 = arith.constant dense<0.000000e+00> : vector<2x8x8xf32>
    %24 = tpu.matmul %23, %19, %cst_19 {dimension_numbers = #tpu.dot_dimension_numbers<[2], [2], [1], [1], [0, 0, 0, 1, 1, 1], [0], [0]>} : vector<2x8x32xbf16>, vector<2x8x32xbf16>, vector<2x8x8xf32> -> vector<2x8x8xf32>
    %25 = arith.truncf %10 : vector<2x8x32xf32> to vector<2x8x32xbf16>
    %cst_20 = arith.constant dense<0.000000e+00> : vector<2x8x8xf32>
    %26 = tpu.matmul %25, %22, %cst_20 {dimension_numbers = #tpu.dot_dimension_numbers<[2], [2], [1], [1], [0, 0, 0, 1, 1, 1], [0], [0]>} : vector<2x8x32xbf16>, vector<2x8x32xbf16>, vector<2x8x8xf32> -> vector<2x8x8xf32>
    %27 = tpu.iota {dimensions = array<i32: 0>} : vector<8x8xi32>
    %28 = vector.broadcast %4 : i32 to vector<8x8xi32>
    %29 = arith.addi %28, %27 : vector<8x8xi32>
    %30 = tpu.iota {dimensions = array<i32: 1>} : vector<8x8xi32>
    %31 = arith.cmpi ne, %29, %30 : vector<8x8xi32>
    %32 = vector.shape_cast %31 : vector<8x8xi1> to vector<1x8x8xi1>
    %33 = vector.shape_cast %12 : vector<2x8xf32> to vector<2x8x1xf32>
    %34 = vector.shape_cast %15 : vector<2x8xf32> to vector<2x1x8xf32>
    %35 = vector.broadcast %33 : vector<2x8x1xf32> to vector<2x8x8xf32>
    %36 = vector.broadcast %34 : vector<2x1x8xf32> to vector<2x8x8xf32>
    %37 = arith.addf %35, %36 : vector<2x8x8xf32>
    %cst_21 = arith.constant 2.000000e+00 : f32
    %38 = vector.broadcast %cst_21 : f32 to vector<2x8x8xf32>
    %39 = arith.mulf %38, %24 : vector<2x8x8xf32>
    %40 = arith.subf %37, %39 : vector<2x8x8xf32>
    %cst_22 = arith.constant 0.000000e+00 : f32
    %41 = vector.broadcast %cst_22 : f32 to vector<2x8x8xf32>
    %42 = arith.maximumf %40, %41 : vector<2x8x8xf32>
    %cst_23 = arith.constant 9.99999993E-9 : f32
    %43 = vector.broadcast %cst_23 : f32 to vector<2x8x8xf32>
    %44 = arith.addf %42, %43 : vector<2x8x8xf32>
    %45 = math.sqrt %44 : vector<2x8x8xf32>
    %46 = vector.shape_cast %14 : vector<2x8xf32> to vector<2x8x1xf32>
    %47 = vector.shape_cast %16 : vector<2x8xf32> to vector<2x1x8xf32>
    %48 = vector.broadcast %46 : vector<2x8x1xf32> to vector<2x8x8xf32>
    %49 = vector.broadcast %47 : vector<2x1x8xf32> to vector<2x8x8xf32>
    %50 = arith.addf %48, %49 : vector<2x8x8xf32>
    %cst_24 = arith.constant 2.000000e+00 : f32
    %51 = vector.broadcast %cst_24 : f32 to vector<2x8x8xf32>
    %52 = arith.mulf %51, %26 : vector<2x8x8xf32>
    %53 = arith.subf %50, %52 : vector<2x8x8xf32>
    %cst_25 = arith.constant 0.000000e+00 : f32
    %54 = vector.broadcast %cst_25 : f32 to vector<2x8x8xf32>
    %55 = arith.maximumf %53, %54 : vector<2x8x8xf32>
    %cst_26 = arith.constant 9.99999993E-9 : f32
    %56 = vector.broadcast %cst_26 : f32 to vector<2x8x8xf32>
    %57 = arith.addf %55, %56 : vector<2x8x8xf32>
    %58 = math.sqrt %57 : vector<2x8x8xf32>
    %59 = arith.subf %45, %58 : vector<2x8x8xf32>
    %cst_27 = arith.constant 0.000000e+00 : f32
    %60 = vector.shape_cast %32 : vector<1x8x8xi1> to vector<1x8x8xi1>
    %61 = vector.broadcast %60 : vector<1x8x8xi1> to vector<2x8x8xi1>
    %62 = vector.broadcast %cst_27 : f32 to vector<2x8x8xf32>
    %63 = arith.select %61, %59, %62 : vector<2x8x8xi1>, vector<2x8x8xf32>
    %64 = arith.mulf %63, %63 : vector<2x8x8xf32>
    %65 = vector.shape_cast %64 : vector<2x8x8xf32> to vector<1x2x8x8xf32>
    %cst_28 = arith.constant dense<0.000000e+00> : vector<1xf32>
    %66 = vector.multi_reduction <add>, %65, %cst_28 [1, 2, 3] : vector<1x2x8x8xf32> to vector<1xf32>
    %67 = vector.shape_cast %66 : vector<1xf32> to vector<1x1x1x1xf32>
    %68 = vector.extract %67[0, 0, 0, 0] : f32 from vector<1x1x1x1xf32>
    %cst_29 = arith.constant 1.000000e-24 : f32
    %69 = vector.broadcast %cst_29 : f32 to vector<2x8xf32>
    %70 = arith.maximumf %12, %69 : vector<2x8xf32>
    %71 = math.rsqrt %70 : vector<2x8xf32>
    %cst_30 = arith.constant 1.000000e-24 : f32
    %72 = vector.broadcast %cst_30 : f32 to vector<2x8xf32>
    %73 = arith.maximumf %15, %72 : vector<2x8xf32>
    %74 = math.rsqrt %73 : vector<2x8xf32>
    %cst_31 = arith.constant 1.000000e-24 : f32
    %75 = vector.broadcast %cst_31 : f32 to vector<2x8xf32>
    %76 = arith.maximumf %14, %75 : vector<2x8xf32>
    %77 = math.rsqrt %76 : vector<2x8xf32>
    %cst_32 = arith.constant 1.000000e-24 : f32
    %78 = vector.broadcast %cst_32 : f32 to vector<2x8xf32>
    %79 = arith.maximumf %16, %78 : vector<2x8xf32>
    %80 = math.rsqrt %79 : vector<2x8xf32>
    %81 = vector.shape_cast %71 : vector<2x8xf32> to vector<2x8x1xf32>
    %82 = vector.broadcast %81 : vector<2x8x1xf32> to vector<2x8x8xf32>
    %83 = arith.mulf %24, %82 : vector<2x8x8xf32>
    %84 = vector.shape_cast %74 : vector<2x8xf32> to vector<2x1x8xf32>
    %85 = vector.broadcast %84 : vector<2x1x8xf32> to vector<2x8x8xf32>
    %86 = arith.mulf %83, %85 : vector<2x8x8xf32>
    %87 = vector.shape_cast %77 : vector<2x8xf32> to vector<2x8x1xf32>
    %88 = vector.broadcast %87 : vector<2x8x1xf32> to vector<2x8x8xf32>
    %89 = arith.mulf %26, %88 : vector<2x8x8xf32>
    %90 = vector.shape_cast %80 : vector<2x8xf32> to vector<2x1x8xf32>
    %91 = vector.broadcast %90 : vector<2x1x8xf32> to vector<2x8x8xf32>
    %92 = arith.mulf %89, %91 : vector<2x8x8xf32>
    %93 = arith.subf %86, %92 : vector<2x8x8xf32>
    %cst_33 = arith.constant 0.000000e+00 : f32
    %94 = vector.shape_cast %32 : vector<1x8x8xi1> to vector<1x8x8xi1>
    %95 = vector.broadcast %94 : vector<1x8x8xi1> to vector<2x8x8xi1>
    %96 = vector.broadcast %cst_33 : f32 to vector<2x8x8xf32>
    %97 = arith.select %95, %93, %96 : vector<2x8x8xi1>, vector<2x8x8xf32>
    %98 = arith.mulf %97, %97 : vector<2x8x8xf32>
    %99 = vector.shape_cast %98 : vector<2x8x8xf32> to vector<1x2x8x8xf32>
    %cst_34 = arith.constant dense<0.000000e+00> : vector<1xf32>
    %100 = vector.multi_reduction <add>, %99, %cst_34 [1, 2, 3] : vector<1x2x8x8xf32> to vector<1xf32>
    %101 = vector.shape_cast %100 : vector<1xf32> to vector<1x1x1x1xf32>
    %102 = vector.extract %101[0, 0, 0, 0] : f32 from vector<1x1x1x1xf32>
    %103 = arith.subf %7, %10 : vector<2x8x32xf32>
    %104 = arith.mulf %103, %103 : vector<2x8x32xf32>
    %105 = vector.shape_cast %104 : vector<2x8x32xf32> to vector<1x2x8x32xf32>
    %cst_35 = arith.constant dense<0.000000e+00> : vector<1xf32>
    %106 = vector.multi_reduction <add>, %105, %cst_35 [1, 2, 3] : vector<1x2x8x32xf32> to vector<1xf32>
    %107 = vector.shape_cast %106 : vector<1xf32> to vector<1x1x1x1xf32>
    %108 = vector.extract %107[0, 0, 0, 0] : f32 from vector<1x1x1x1xf32>
    %109 = arith.mulf %7, %10 : vector<2x8x32xf32>
    %110 = vector.shape_cast %109 : vector<2x8x32xf32> to vector<1x2x8x32xf32>
    %cst_36 = arith.constant dense<0.000000e+00> : vector<1xf32>
    %111 = vector.multi_reduction <add>, %110, %cst_36 [1, 2, 3] : vector<1x2x8x32xf32> to vector<1xf32>
    %112 = vector.shape_cast %111 : vector<1xf32> to vector<1x1x1x1xf32>
    %113 = vector.extract %112[0, 0, 0, 0] : f32 from vector<1x1x1x1xf32>
    %114 = tpu.iota {dimensions = array<i32: 1>} : vector<2x2xi32>
    %cst_37 = arith.constant 0.000000e+00 : f32
    %115 = vector.broadcast %cst_37 : f32 to vector<2x2xf32>
    %cst_38 = arith.constant 0.000000e+00 : f32
    %116 = vector.broadcast %cst_38 : f32 to vector<2x2xf32>
    %117 = vector.extract_strided_slice %7 {offsets = [0, 0, 0], sizes = [1, 8, 32], strides = [1, 1, 1]} : vector<2x8x32xf32> to vector<1x8x32xf32>
    %118 = vector.shape_cast %117 : vector<1x8x32xf32> to vector<8x32xf32>
    %119 = vector.shape_cast %118 : vector<8x32xf32> to vector<1x8x32xf32>
    %120 = vector.broadcast %119 : vector<1x8x32xf32> to vector<2x8x32xf32>
    %121 = arith.mulf %7, %120 : vector<2x8x32xf32>
    %cst_39 = arith.constant dense<0.000000e+00> : vector<2x8xf32>
    %122 = vector.multi_reduction <add>, %121, %cst_39 [2] : vector<2x8x32xf32> to vector<2x8xf32>
    %cst_40 = arith.constant dense<0.000000e+00> : vector<2xf32>
    %123 = vector.multi_reduction <add>, %122, %cst_40 [1] : vector<2x8xf32> to vector<2xf32>
    %124 = vector.shape_cast %123 : vector<2xf32> to vector<2x1xf32>
    %125 = vector.extract_strided_slice %10 {offsets = [0, 0, 0], sizes = [1, 8, 32], strides = [1, 1, 1]} : vector<2x8x32xf32> to vector<1x8x32xf32>
    %126 = vector.shape_cast %125 : vector<1x8x32xf32> to vector<8x32xf32>
    %127 = vector.shape_cast %126 : vector<8x32xf32> to vector<1x8x32xf32>
    %128 = vector.broadcast %127 : vector<1x8x32xf32> to vector<2x8x32xf32>
    %129 = arith.mulf %10, %128 : vector<2x8x32xf32>
    %cst_41 = arith.constant dense<0.000000e+00> : vector<2x8xf32>
    %130 = vector.multi_reduction <add>, %129, %cst_41 [2] : vector<2x8x32xf32> to vector<2x8xf32>
    %cst_42 = arith.constant dense<0.000000e+00> : vector<2xf32>
    %131 = vector.multi_reduction <add>, %130, %cst_42 [1] : vector<2x8xf32> to vector<2xf32>
    %132 = vector.shape_cast %131 : vector<2xf32> to vector<2x1xf32>
    %c0_i32_43 = arith.constant 0 : i32
    %133 = vector.broadcast %c0_i32_43 : i32 to vector<2x2xi32>
    %134 = arith.cmpi eq, %114, %133 : vector<2x2xi32>
    %135 = vector.shape_cast %124 : vector<2x1xf32> to vector<2x1xf32>
    %136 = vector.broadcast %135 : vector<2x1xf32> to vector<2x2xf32>
    %137 = arith.select %134, %136, %115 : vector<2x2xi1>, vector<2x2xf32>
    %c0_i32_44 = arith.constant 0 : i32
    %138 = vector.broadcast %c0_i32_44 : i32 to vector<2x2xi32>
    %139 = arith.cmpi eq, %114, %138 : vector<2x2xi32>
    %140 = vector.shape_cast %132 : vector<2x1xf32> to vector<2x1xf32>
    %141 = vector.broadcast %140 : vector<2x1xf32> to vector<2x2xf32>
    %142 = arith.select %139, %141, %116 : vector<2x2xi1>, vector<2x2xf32>
    %143 = vector.extract_strided_slice %7 {offsets = [1, 0, 0], sizes = [1, 8, 32], strides = [1, 1, 1]} : vector<2x8x32xf32> to vector<1x8x32xf32>
    %144 = vector.shape_cast %143 : vector<1x8x32xf32> to vector<8x32xf32>
    %145 = vector.shape_cast %144 : vector<8x32xf32> to vector<1x8x32xf32>
    %146 = vector.broadcast %145 : vector<1x8x32xf32> to vector<2x8x32xf32>
    %147 = arith.mulf %7, %146 : vector<2x8x32xf32>
    %cst_45 = arith.constant dense<0.000000e+00> : vector<2x8xf32>
    %148 = vector.multi_reduction <add>, %147, %cst_45 [2] : vector<2x8x32xf32> to vector<2x8xf32>
    %cst_46 = arith.constant dense<0.000000e+00> : vector<2xf32>
    %149 = vector.multi_reduction <add>, %148, %cst_46 [1] : vector<2x8xf32> to vector<2xf32>
    %150 = vector.shape_cast %149 : vector<2xf32> to vector<2x1xf32>
    %151 = vector.extract_strided_slice %10 {offsets = [1, 0, 0], sizes = [1, 8, 32], strides = [1, 1, 1]} : vector<2x8x32xf32> to vector<1x8x32xf32>
    %152 = vector.shape_cast %151 : vector<1x8x32xf32> to vector<8x32xf32>
    %153 = vector.shape_cast %152 : vector<8x32xf32> to vector<1x8x32xf32>
    %154 = vector.broadcast %153 : vector<1x8x32xf32> to vector<2x8x32xf32>
    %155 = arith.mulf %10, %154 : vector<2x8x32xf32>
    %cst_47 = arith.constant dense<0.000000e+00> : vector<2x8xf32>
    %156 = vector.multi_reduction <add>, %155, %cst_47 [2] : vector<2x8x32xf32> to vector<2x8xf32>
    %cst_48 = arith.constant dense<0.000000e+00> : vector<2xf32>
    %157 = vector.multi_reduction <add>, %156, %cst_48 [1] : vector<2x8xf32> to vector<2xf32>
    %158 = vector.shape_cast %157 : vector<2xf32> to vector<2x1xf32>
    %c1_i32 = arith.constant 1 : i32
    %159 = vector.broadcast %c1_i32 : i32 to vector<2x2xi32>
    %160 = arith.cmpi eq, %114, %159 : vector<2x2xi32>
    %161 = vector.shape_cast %150 : vector<2x1xf32> to vector<2x1xf32>
    %162 = vector.broadcast %161 : vector<2x1xf32> to vector<2x2xf32>
    %163 = arith.select %160, %162, %137 : vector<2x2xi1>, vector<2x2xf32>
    %c1_i32_49 = arith.constant 1 : i32
    %164 = vector.broadcast %c1_i32_49 : i32 to vector<2x2xi32>
    %165 = arith.cmpi eq, %114, %164 : vector<2x2xi32>
    %166 = vector.shape_cast %158 : vector<2x1xf32> to vector<2x1xf32>
    %167 = vector.broadcast %166 : vector<2x1xf32> to vector<2x2xf32>
    %168 = arith.select %165, %167, %142 : vector<2x2xi1>, vector<2x2xf32>
    %c0_50 = arith.constant 0 : index
    %c0_51 = arith.constant 0 : index
    %169 = vector.load %arg7[%c0_50, %c0_51] : memref<2x2xf32, #tpu.memory_space<vmem>>, vector<2x2xf32>
    %170 = arith.addf %169, %163 : vector<2x2xf32>
    %c0_52 = arith.constant 0 : index
    %c0_53 = arith.constant 0 : index
    %171 = vector.load %arg7[%c0_52, %c0_53] : memref<2x2xf32, #tpu.memory_space<vmem>>, vector<2x2xf32>
    tpu.vector_store %arg7[%c0_52, %c0_53], %170 {strides = array<i32>} : memref<2x2xf32, #tpu.memory_space<vmem>>, vector<2x2xf32>,
    %c0_54 = arith.constant 0 : index
    %c0_55 = arith.constant 0 : index
    %172 = vector.load %arg8[%c0_54, %c0_55] : memref<2x2xf32, #tpu.memory_space<vmem>>, vector<2x2xf32>
    %173 = arith.addf %172, %168 : vector<2x2xf32>
    %c0_56 = arith.constant 0 : index
    %c0_57 = arith.constant 0 : index
    %174 = vector.load %arg8[%c0_56, %c0_57] : memref<2x2xf32, #tpu.memory_space<vmem>>, vector<2x2xf32>
    tpu.vector_store %arg8[%c0_56, %c0_57], %173 {strides = array<i32>} : memref<2x2xf32, #tpu.memory_space<vmem>>, vector<2x2xf32>,
    %175 = tpu.iota {dimensions = array<i32: 0>} : vector<8x128xi32>
    %176 = tpu.iota {dimensions = array<i32: 1>} : vector<8x128xi32>
    %cst_58 = arith.constant 0.000000e+00 : f32
    %177 = vector.broadcast %cst_58 : f32 to vector<8x128xf32>
    %c0_i32_59 = arith.constant 0 : i32
    %178 = vector.broadcast %c0_i32_59 : i32 to vector<8x128xi32>
    %179 = arith.cmpi eq, %175, %178 : vector<8x128xi32>
    %c0_i32_60 = arith.constant 0 : i32
    %180 = vector.broadcast %c0_i32_60 : i32 to vector<8x128xi32>
    %181 = arith.cmpi eq, %176, %180 : vector<8x128xi32>
    %182 = arith.andi %179, %181 : vector<8x128xi1>
    %183 = vector.broadcast %68 : f32 to vector<8x128xf32>
    %184 = arith.select %182, %183, %177 : vector<8x128xi1>, vector<8x128xf32>
    %c0_i32_61 = arith.constant 0 : i32
    %185 = vector.broadcast %c0_i32_61 : i32 to vector<8x128xi32>
    %186 = arith.cmpi eq, %175, %185 : vector<8x128xi32>
    %c1_i32_62 = arith.constant 1 : i32
    %187 = vector.broadcast %c1_i32_62 : i32 to vector<8x128xi32>
    %188 = arith.cmpi eq, %176, %187 : vector<8x128xi32>
    %189 = arith.andi %186, %188 : vector<8x128xi1>
    %190 = vector.broadcast %102 : f32 to vector<8x128xf32>
    %191 = arith.select %189, %190, %184 : vector<8x128xi1>, vector<8x128xf32>
    %c0_i32_63 = arith.constant 0 : i32
    %192 = vector.broadcast %c0_i32_63 : i32 to vector<8x128xi32>
    %193 = arith.cmpi eq, %175, %192 : vector<8x128xi32>
    %c2_i32 = arith.constant 2 : i32
    %194 = vector.broadcast %c2_i32 : i32 to vector<8x128xi32>
    %195 = arith.cmpi eq, %176, %194 : vector<8x128xi32>
    %196 = arith.andi %193, %195 : vector<8x128xi1>
    %197 = vector.broadcast %108 : f32 to vector<8x128xf32>
    %198 = arith.select %196, %197, %191 : vector<8x128xi1>, vector<8x128xf32>
    %c0_i32_64 = arith.constant 0 : i32
    %199 = vector.broadcast %c0_i32_64 : i32 to vector<8x128xi32>
    %200 = arith.cmpi eq, %175, %199 : vector<8x128xi32>
    %c3_i32 = arith.constant 3 : i32
    %201 = vector.broadcast %c3_i32 : i32 to vector<8x128xi32>
    %202 = arith.cmpi eq, %176, %201 : vector<8x128xi32>
    %203 = arith.andi %200, %202 : vector<8x128xi1>
    %204 = vector.broadcast %113 : f32 to vector<8x128xf32>
    %205 = arith.select %203, %204, %198 : vector<8x128xi1>, vector<8x128xf32>
    %c0_65 = arith.constant 0 : index
    %c0_66 = arith.constant 0 : index
    %206 = vector.load %arg9[%c0_65, %c0_66] : memref<8x128xf32, #tpu.memory_space<vmem>>, vector<8x128xf32>
    %207 = arith.addf %206, %205 : vector<8x128xf32>
    %c0_67 = arith.constant 0 : index
    %c0_68 = arith.constant 0 : index
    %208 = vector.load %arg9[%c0_67, %c0_68] : memref<8x128xf32, #tpu.memory_space<vmem>>, vector<8x128xf32>
    tpu.vector_store %arg9[%c0_67, %c0_68], %207 {strides = array<i32>} : memref<8x128xf32, #tpu.memory_space<vmem>>, vector<8x128xf32>,
    %c0_i32_69 = arith.constant 0 : i32
    %209 = arith.cmpi eq, %arg1, %c0_i32_69 : i32
    %210 = arith.extui %209 : i1 to i32
    %c0_i32_70 = arith.constant 0 : i32
    %211 = arith.cmpi ne, %210, %c0_i32_70 : i32
    scf.if %211 {
      %c0_71 = arith.constant 0 : index
      %c0_72 = arith.constant 0 : index
      %212 = vector.load %arg9[%c0_71, %c0_72] : memref<8x128xf32, #tpu.memory_space<vmem>>, vector<8x128xf32>
      %c0_i32_73 = arith.constant 0 : i32
      %213 = vector.broadcast %c0_i32_73 : i32 to vector<8x128xi32>
      %214 = arith.cmpi eq, %175, %213 : vector<8x128xi32>
      %c0_i32_74 = arith.constant 0 : i32
      %215 = vector.broadcast %c0_i32_74 : i32 to vector<8x128xi32>
      %216 = arith.cmpi eq, %176, %215 : vector<8x128xi32>
      %217 = arith.andi %214, %216 : vector<8x128xi1>
      %cst_75 = arith.constant 0.000000e+00 : f32
      %218 = vector.broadcast %cst_75 : f32 to vector<8x128xf32>
      %219 = arith.select %217, %212, %218 : vector<8x128xi1>, vector<8x128xf32>
      %220 = vector.shape_cast %219 : vector<8x128xf32> to vector<1x8x128xf32>
      %cst_76 = arith.constant dense<0.000000e+00> : vector<1xf32>
      %221 = vector.multi_reduction <add>, %220, %cst_76 [1, 2] : vector<1x8x128xf32> to vector<1xf32>
      %222 = vector.shape_cast %221 : vector<1xf32> to vector<1x1x1xf32>
      %223 = vector.extract %222[0, 0, 0] : f32 from vector<1x1x1xf32>
      %c0_i32_77 = arith.constant 0 : i32
      %224 = vector.broadcast %c0_i32_77 : i32 to vector<8x128xi32>
      %225 = arith.cmpi eq, %175, %224 : vector<8x128xi32>
      %c1_i32_78 = arith.constant 1 : i32
      %226 = vector.broadcast %c1_i32_78 : i32 to vector<8x128xi32>
      %227 = arith.cmpi eq, %176, %226 : vector<8x128xi32>
      %228 = arith.andi %225, %227 : vector<8x128xi1>
      %cst_79 = arith.constant 0.000000e+00 : f32
      %229 = vector.broadcast %cst_79 : f32 to vector<8x128xf32>
      %230 = arith.select %228, %212, %229 : vector<8x128xi1>, vector<8x128xf32>
      %231 = vector.shape_cast %230 : vector<8x128xf32> to vector<1x8x128xf32>
      %cst_80 = arith.constant dense<0.000000e+00> : vector<1xf32>
      %232 = vector.multi_reduction <add>, %231, %cst_80 [1, 2] : vector<1x8x128xf32> to vector<1xf32>
      %233 = vector.shape_cast %232 : vector<1xf32> to vector<1x1x1xf32>
      %234 = vector.extract %233[0, 0, 0] : f32 from vector<1x1x1xf32>
      %c0_i32_81 = arith.constant 0 : i32
      %235 = vector.broadcast %c0_i32_81 : i32 to vector<8x128xi32>
      %236 = arith.cmpi eq, %175, %235 : vector<8x128xi32>
      %c2_i32_82 = arith.constant 2 : i32
      %237 = vector.broadcast %c2_i32_82 : i32 to vector<8x128xi32>
      %238 = arith.cmpi eq, %176, %237 : vector<8x128xi32>
      %239 = arith.andi %236, %238 : vector<8x128xi1>
      %cst_83 = arith.constant 0.000000e+00 : f32
      %240 = vector.broadcast %cst_83 : f32 to vector<8x128xf32>
      %241 = arith.select %239, %212, %240 : vector<8x128xi1>, vector<8x128xf32>
      %242 = vector.shape_cast %241 : vector<8x128xf32> to vector<1x8x128xf32>
      %cst_84 = arith.constant dense<0.000000e+00> : vector<1xf32>
      %243 = vector.multi_reduction <add>, %242, %cst_84 [1, 2] : vector<1x8x128xf32> to vector<1xf32>
      %244 = vector.shape_cast %243 : vector<1xf32> to vector<1x1x1xf32>
      %245 = vector.extract %244[0, 0, 0] : f32 from vector<1x1x1xf32>
      %c0_i32_85 = arith.constant 0 : i32
      %246 = vector.broadcast %c0_i32_85 : i32 to vector<8x128xi32>
      %247 = arith.cmpi eq, %175, %246 : vector<8x128xi32>
      %c3_i32_86 = arith.constant 3 : i32
      %248 = vector.broadcast %c3_i32_86 : i32 to vector<8x128xi32>
      %249 = arith.cmpi eq, %176, %248 : vector<8x128xi32>
      %250 = arith.andi %247, %249 : vector<8x128xi1>
      %cst_87 = arith.constant 0.000000e+00 : f32
      %251 = vector.broadcast %cst_87 : f32 to vector<8x128xf32>
      %252 = arith.select %250, %212, %251 : vector<8x128xi1>, vector<8x128xf32>
      %253 = vector.shape_cast %252 : vector<8x128xf32> to vector<1x8x128xf32>
      %cst_88 = arith.constant dense<0.000000e+00> : vector<1xf32>
      %254 = vector.multi_reduction <add>, %253, %cst_88 [1, 2] : vector<1x8x128xf32> to vector<1xf32>
      %255 = vector.shape_cast %254 : vector<1xf32> to vector<1x1x1xf32>
      %256 = vector.extract %255[0, 0, 0] : f32 from vector<1x1x1xf32>
      %cst_89 = arith.constant 1.280000e+02 : f32
      %257 = arith.divf %223, %cst_89 : f32
      %cst_90 = arith.constant 1.280000e+02 : f32
      %258 = arith.divf %234, %cst_90 : f32
      %cst_91 = arith.constant 5.120000e+02 : f32
      %259 = arith.divf %245, %cst_91 : f32
      %c0_92 = arith.constant 0 : index
      %c0_93 = arith.constant 0 : index
      %260 = vector.load %arg5[%c0_92, %c0_93] : memref<2x8xf32, #tpu.memory_space<vmem>>, vector<2x8xf32>
      %261 = vector.shape_cast %260 : vector<2x8xf32> to vector<1x2x8xf32>
      %cst_94 = arith.constant dense<0.000000e+00> : vector<1xf32>
      %262 = vector.multi_reduction <add>, %261, %cst_94 [1, 2] : vector<1x2x8xf32> to vector<1xf32>
      %263 = vector.shape_cast %262 : vector<1xf32> to vector<1x1x1xf32>
      %264 = vector.extract %263[0, 0, 0] : f32 from vector<1x1x1xf32>
      %c0_95 = arith.constant 0 : index
      %c0_96 = arith.constant 0 : index
      %265 = vector.load %arg6[%c0_95, %c0_96] : memref<2x8xf32, #tpu.memory_space<vmem>>, vector<2x8xf32>
      %266 = vector.shape_cast %265 : vector<2x8xf32> to vector<1x2x8xf32>
      %cst_97 = arith.constant dense<0.000000e+00> : vector<1xf32>
      %267 = vector.multi_reduction <add>, %266, %cst_97 [1, 2] : vector<1x2x8xf32> to vector<1xf32>
      %268 = vector.shape_cast %267 : vector<1xf32> to vector<1x1x1xf32>
      %269 = vector.extract %268[0, 0, 0] : f32 from vector<1x1x1xf32>
      %270 = math.sqrt %264 : f32
      %271 = math.sqrt %269 : f32
      %272 = arith.mulf %270, %271 : f32
      %cst_98 = arith.constant 9.99999993E-9 : f32
      %273 = arith.maximumf %272, %cst_98 : f32
      %274 = arith.divf %256, %273 : f32
      %275 = math.absf %274 : f32
      %276 = math.log %275 : f32
      %cst_99 = arith.constant 0.000000e+00 : f32
      %277 = arith.subf %cst_99, %276 : f32
      %c0_100 = arith.constant 0 : index
      %c0_101 = arith.constant 0 : index
      %278 = vector.load %arg7[%c0_100, %c0_101] : memref<2x2xf32, #tpu.memory_space<vmem>>, vector<2x2xf32>
      %c0_102 = arith.constant 0 : index
      %c0_103 = arith.constant 0 : index
      %279 = vector.load %arg8[%c0_102, %c0_103] : memref<2x2xf32, #tpu.memory_space<vmem>>, vector<2x2xf32>
      %280 = tpu.iota {dimensions = array<i32: 0>} : vector<2x2xi32>
      %281 = tpu.iota {dimensions = array<i32: 1>} : vector<2x2xi32>
      %282 = arith.cmpi eq, %280, %281 : vector<2x2xi32>
      %cst_104 = arith.constant 0.000000e+00 : f32
      %283 = vector.broadcast %cst_104 : f32 to vector<2x2xf32>
      %284 = arith.select %282, %278, %283 : vector<2x2xi1>, vector<2x2xf32>
      %cst_105 = arith.constant dense<0.000000e+00> : vector<2xf32>
      %285 = vector.multi_reduction <add>, %284, %cst_105 [1] : vector<2x2xf32> to vector<2xf32>
      %286 = vector.shape_cast %285 : vector<2xf32> to vector<2x1xf32>
      %cst_106 = arith.constant 0.000000e+00 : f32
      %287 = vector.broadcast %cst_106 : f32 to vector<2x2xf32>
      %288 = arith.select %282, %278, %287 : vector<2x2xi1>, vector<2x2xf32>
      %cst_107 = arith.constant dense<0.000000e+00> : vector<2xf32>
      %289 = vector.multi_reduction <add>, %288, %cst_107 [0] : vector<2x2xf32> to vector<2xf32>
      %290 = vector.shape_cast %289 : vector<2xf32> to vector<1x2xf32>
      %cst_108 = arith.constant 0.000000e+00 : f32
      %291 = vector.broadcast %cst_108 : f32 to vector<2x2xf32>
      %292 = arith.select %282, %279, %291 : vector<2x2xi1>, vector<2x2xf32>
      %cst_109 = arith.constant dense<0.000000e+00> : vector<2xf32>
      %293 = vector.multi_reduction <add>, %292, %cst_109 [1] : vector<2x2xf32> to vector<2xf32>
      %294 = vector.shape_cast %293 : vector<2xf32> to vector<2x1xf32>
      %cst_110 = arith.constant 0.000000e+00 : f32
      %295 = vector.broadcast %cst_110 : f32 to vector<2x2xf32>
      %296 = arith.select %282, %279, %295 : vector<2x2xi1>, vector<2x2xf32>
      %cst_111 = arith.constant dense<0.000000e+00> : vector<2xf32>
      %297 = vector.multi_reduction <add>, %296, %cst_111 [0] : vector<2x2xf32> to vector<2xf32>
      %298 = vector.shape_cast %297 : vector<2xf32> to vector<1x2xf32>
      %299 = vector.broadcast %286 : vector<2x1xf32> to vector<2x2xf32>
      %300 = vector.broadcast %290 : vector<1x2xf32> to vector<2x2xf32>
      %301 = arith.addf %299, %300 : vector<2x2xf32>
      %cst_112 = arith.constant 2.000000e+00 : f32
      %302 = vector.broadcast %cst_112 : f32 to vector<2x2xf32>
      %303 = arith.mulf %302, %278 : vector<2x2xf32>
      %304 = arith.subf %301, %303 : vector<2x2xf32>
      %cst_113 = arith.constant 0.000000e+00 : f32
      %305 = vector.broadcast %cst_113 : f32 to vector<2x2xf32>
      %306 = arith.maximumf %304, %305 : vector<2x2xf32>
      %cst_114 = arith.constant 9.99999993E-9 : f32
      %307 = vector.broadcast %cst_114 : f32 to vector<2x2xf32>
      %308 = arith.addf %306, %307 : vector<2x2xf32>
      %309 = math.sqrt %308 : vector<2x2xf32>
      %310 = vector.broadcast %294 : vector<2x1xf32> to vector<2x2xf32>
      %311 = vector.broadcast %298 : vector<1x2xf32> to vector<2x2xf32>
      %312 = arith.addf %310, %311 : vector<2x2xf32>
      %cst_115 = arith.constant 2.000000e+00 : f32
      %313 = vector.broadcast %cst_115 : f32 to vector<2x2xf32>
      %314 = arith.mulf %313, %279 : vector<2x2xf32>
      %315 = arith.subf %312, %314 : vector<2x2xf32>
      %cst_116 = arith.constant 0.000000e+00 : f32
      %316 = vector.broadcast %cst_116 : f32 to vector<2x2xf32>
      %317 = arith.maximumf %315, %316 : vector<2x2xf32>
      %cst_117 = arith.constant 9.99999993E-9 : f32
      %318 = vector.broadcast %cst_117 : f32 to vector<2x2xf32>
      %319 = arith.addf %317, %318 : vector<2x2xf32>
      %320 = math.sqrt %319 : vector<2x2xf32>
      %321 = arith.subf %309, %320 : vector<2x2xf32>
      %cst_118 = arith.constant 0.000000e+00 : f32
      %322 = vector.broadcast %cst_118 : f32 to vector<2x2xf32>
      %323 = arith.select %282, %322, %321 : vector<2x2xi1>, vector<2x2xf32>
      %324 = arith.mulf %323, %323 : vector<2x2xf32>
      %325 = vector.shape_cast %324 : vector<2x2xf32> to vector<1x2x2xf32>
      %cst_119 = arith.constant dense<0.000000e+00> : vector<1xf32>
      %326 = vector.multi_reduction <add>, %325, %cst_119 [1, 2] : vector<1x2x2xf32> to vector<1xf32>
      %327 = vector.shape_cast %326 : vector<1xf32> to vector<1x1x1xf32>
      %328 = vector.extract %327[0, 0, 0] : f32 from vector<1x1x1xf32>
      %cst_120 = arith.constant 4.000000e+00 : f32
      %329 = arith.divf %328, %cst_120 : f32
      %cst_121 = arith.constant 1.000000e-24 : f32
      %330 = vector.broadcast %cst_121 : f32 to vector<2x1xf32>
      %331 = arith.maximumf %286, %330 : vector<2x1xf32>
      %332 = math.rsqrt %331 : vector<2x1xf32>
      %333 = vector.broadcast %332 : vector<2x1xf32> to vector<2x2xf32>
      %334 = arith.mulf %278, %333 : vector<2x2xf32>
      %cst_122 = arith.constant 1.000000e-24 : f32
      %335 = vector.broadcast %cst_122 : f32 to vector<1x2xf32>
      %336 = arith.maximumf %290, %335 : vector<1x2xf32>
      %337 = math.rsqrt %336 : vector<1x2xf32>
      %338 = vector.broadcast %337 : vector<1x2xf32> to vector<2x2xf32>
      %339 = arith.mulf %334, %338 : vector<2x2xf32>
      %cst_123 = arith.constant 1.000000e-24 : f32
      %340 = vector.broadcast %cst_123 : f32 to vector<2x1xf32>
      %341 = arith.maximumf %294, %340 : vector<2x1xf32>
      %342 = math.rsqrt %341 : vector<2x1xf32>
      %343 = vector.broadcast %342 : vector<2x1xf32> to vector<2x2xf32>
      %344 = arith.mulf %279, %343 : vector<2x2xf32>
      %cst_124 = arith.constant 1.000000e-24 : f32
      %345 = vector.broadcast %cst_124 : f32 to vector<1x2xf32>
      %346 = arith.maximumf %298, %345 : vector<1x2xf32>
      %347 = math.rsqrt %346 : vector<1x2xf32>
      %348 = vector.broadcast %347 : vector<1x2xf32> to vector<2x2xf32>
      %349 = arith.mulf %344, %348 : vector<2x2xf32>
      %350 = arith.subf %339, %349 : vector<2x2xf32>
      %cst_125 = arith.constant 0.000000e+00 : f32
      %351 = vector.broadcast %cst_125 : f32 to vector<2x2xf32>
      %352 = arith.select %282, %351, %350 : vector<2x2xi1>, vector<2x2xf32>
      %353 = arith.mulf %352, %352 : vector<2x2xf32>
      %354 = vector.shape_cast %353 : vector<2x2xf32> to vector<1x2x2xf32>
      %cst_126 = arith.constant dense<0.000000e+00> : vector<1xf32>
      %355 = vector.multi_reduction <add>, %354, %cst_126 [1, 2] : vector<1x2x2xf32> to vector<1xf32>
      %356 = vector.shape_cast %355 : vector<1xf32> to vector<1x1x1xf32>
      %357 = vector.extract %356[0, 0, 0] : f32 from vector<1x1x1xf32>
      %cst_127 = arith.constant 4.000000e+00 : f32
      %358 = arith.divf %357, %cst_127 : f32
      %cst_128 = arith.constant 0.000000e+00 : f32
      %359 = vector.broadcast %cst_128 : f32 to vector<8x128xf32>
      %c0_i32_129 = arith.constant 0 : i32
      %360 = vector.broadcast %c0_i32_129 : i32 to vector<8x128xi32>
      %361 = arith.cmpi eq, %175, %360 : vector<8x128xi32>
      %c0_i32_130 = arith.constant 0 : i32
      %362 = vector.broadcast %c0_i32_130 : i32 to vector<8x128xi32>
      %363 = arith.cmpi eq, %176, %362 : vector<8x128xi32>
      %364 = arith.andi %361, %363 : vector<8x128xi1>
      %365 = vector.broadcast %257 : f32 to vector<8x128xf32>
      %366 = arith.select %364, %365, %359 : vector<8x128xi1>, vector<8x128xf32>
      %c0_i32_131 = arith.constant 0 : i32
      %367 = vector.broadcast %c0_i32_131 : i32 to vector<8x128xi32>
      %368 = arith.cmpi eq, %175, %367 : vector<8x128xi32>
      %c1_i32_132 = arith.constant 1 : i32
      %369 = vector.broadcast %c1_i32_132 : i32 to vector<8x128xi32>
      %370 = arith.cmpi eq, %176, %369 : vector<8x128xi32>
      %371 = arith.andi %368, %370 : vector<8x128xi1>
      %372 = vector.broadcast %258 : f32 to vector<8x128xf32>
      %373 = arith.select %371, %372, %366 : vector<8x128xi1>, vector<8x128xf32>
      %c0_i32_133 = arith.constant 0 : i32
      %374 = vector.broadcast %c0_i32_133 : i32 to vector<8x128xi32>
      %375 = arith.cmpi eq, %175, %374 : vector<8x128xi32>
      %c2_i32_134 = arith.constant 2 : i32
      %376 = vector.broadcast %c2_i32_134 : i32 to vector<8x128xi32>
      %377 = arith.cmpi eq, %176, %376 : vector<8x128xi32>
      %378 = arith.andi %375, %377 : vector<8x128xi1>
      %379 = vector.broadcast %259 : f32 to vector<8x128xf32>
      %380 = arith.select %378, %379, %373 : vector<8x128xi1>, vector<8x128xf32>
      %c0_i32_135 = arith.constant 0 : i32
      %381 = vector.broadcast %c0_i32_135 : i32 to vector<8x128xi32>
      %382 = arith.cmpi eq, %175, %381 : vector<8x128xi32>
      %c3_i32_136 = arith.constant 3 : i32
      %383 = vector.broadcast %c3_i32_136 : i32 to vector<8x128xi32>
      %384 = arith.cmpi eq, %176, %383 : vector<8x128xi32>
      %385 = arith.andi %382, %384 : vector<8x128xi1>
      %386 = vector.broadcast %277 : f32 to vector<8x128xf32>
      %387 = arith.select %385, %386, %380 : vector<8x128xi1>, vector<8x128xf32>
      %c0_i32_137 = arith.constant 0 : i32
      %388 = vector.broadcast %c0_i32_137 : i32 to vector<8x128xi32>
      %389 = arith.cmpi eq, %175, %388 : vector<8x128xi32>
      %c4_i32 = arith.constant 4 : i32
      %390 = vector.broadcast %c4_i32 : i32 to vector<8x128xi32>
      %391 = arith.cmpi eq, %176, %390 : vector<8x128xi32>
      %392 = arith.andi %389, %391 : vector<8x128xi1>
      %393 = vector.broadcast %329 : f32 to vector<8x128xf32>
      %394 = arith.select %392, %393, %387 : vector<8x128xi1>, vector<8x128xf32>
      %c0_i32_138 = arith.constant 0 : i32
      %395 = vector.broadcast %c0_i32_138 : i32 to vector<8x128xi32>
      %396 = arith.cmpi eq, %175, %395 : vector<8x128xi32>
      %c5_i32 = arith.constant 5 : i32
      %397 = vector.broadcast %c5_i32 : i32 to vector<8x128xi32>
      %398 = arith.cmpi eq, %176, %397 : vector<8x128xi32>
      %399 = arith.andi %396, %398 : vector<8x128xi1>
      %400 = vector.broadcast %358 : f32 to vector<8x128xf32>
      %401 = arith.select %399, %400, %394 : vector<8x128xi1>, vector<8x128xf32>
      %c0_139 = arith.constant 0 : index
      %c0_140 = arith.constant 0 : index
      %c0_141 = arith.constant 0 : index
      %402 = vector.load %arg4[%c0_139, %c0_140, %c0_141] : memref<1x8x128xf32, #tpu.memory_space<vmem>>, vector<1x8x128xf32>
      %403 = vector.shape_cast %402 : vector<1x8x128xf32> to vector<8x128xf32>
      %404 = vector.shape_cast %401 : vector<8x128xf32> to vector<1x8x128xf32>
      tpu.vector_store %arg4[%c0_139, %c0_140, %c0_141], %404 {strides = array<i32>} : memref<1x8x128xf32, #tpu.memory_space<vmem>>, vector<1x8x128xf32>,
    } else {
    }
    return
  }
  func.func @transform_0(%arg0: i32, %arg1: i32) -> (i32, i32, i32, i32) {
    %c0_i32 = arith.constant 0 : i32
    %c0_i32_0 = arith.constant 0 : i32
    %c0_i32_1 = arith.constant 0 : i32
    %c0_i32_2 = arith.constant 0 : i32
    return %arg0, %c0_i32, %c0_i32_0, %c0_i32_1 : i32, i32, i32, i32
  }
  func.func @transform_1(%arg0: i32, %arg1: i32) -> (i32, i32, i32, i32) {
    %c0_i32 = arith.constant 0 : i32
    %c0_i32_0 = arith.constant 0 : i32
    %c0_i32_1 = arith.constant 0 : i32
    %c0_i32_2 = arith.constant 0 : i32
    return %arg0, %c0_i32, %c0_i32_0, %c0_i32_1 : i32, i32, i32, i32
  }
  func.func @transform_2(%arg0: i32, %arg1: i32) -> (i32, i32, i32) {
    %c0_i32 = arith.constant 0 : i32
    %c0_i32_0 = arith.constant 0 : i32
    %c0_i32_1 = arith.constant 0 : i32
    return %arg0, %c0_i32, %c0_i32_0 : i32, i32, i32
  }
}

</mosaic_0001>

<llo_original>
// kernel: tpu_custom_call.1
$region0: #{tpu_custom_call.1}
  #allocation0 [shape = 'u32[]', space=smem, size = 0x4, offset = 0x4, fixed_abs, tag = 'smem constant byte address 0x4 - core index']
  #allocation1 [shape = 'u32[72,128]{1,0:T(1,128)}', space=vmem, size = 0x9000, scoped, tag = 'internal scratch']
  #allocation2 [shape = 'f32[2,8]{1,0:T(2,128)}', space=vmem, size = 0x400, scoped, tag = 'scratch operand']
  #allocation3 [shape = 'f32[2,8]{1,0:T(2,128)}', space=vmem, size = 0x400, scoped, tag = 'scratch operand']
  #allocation4 [shape = 'f32[2,2]{1,0:T(2,128)}', space=vmem, size = 0x400, scoped, tag = 'scratch operand']
  #allocation5 [shape = 'f32[2,2]{1,0:T(2,128)}', space=vmem, size = 0x400, scoped, tag = 'scratch operand']
  #allocation6 [shape = 'f32[8,128]{1,0:T(8,128)}', space=vmem, size = 0x1000, scoped, tag = 'scratch operand']
  %s0 = inlined_call_operand.hbm [shape: f32[2,2,8,32], index: 0, kind: input, shape index: {}]
  %s1 = inlined_call_operand.hbm [shape: f32[2,2,8,32], index: 1, kind: input, shape index: {}]
  %s2 = inlined_call_operand.hbm [shape: f32[2,8,128], index: 2, kind: output, shape index: {}]
  %s3 = sld [smem:[#allocation0]]
  $region57: #{tpu_custom_call.1} parent=0
    _
  %s5 = ssub.s32 1, %s3
  %s6 = scalar_select 0, %s5, %s3
  $region1: #{tpu_custom_call.1} parent=0
    #allocation7 [shape = 'u8[16384]{0}', space=vmem, size = 0x4000, scoped, tag = 'input window, operand 0']
    #allocation8 [shape = 's32[2]{0}', space=sflag, size = 0x8, scoped, tag = 'scoped memory for tpu_custom_call.1']
    #allocation9 [shape = 's32[2]{0}', space=sflag, size = 0x8, scoped, tag = 'scoped memory for tpu_custom_call.1']
    #allocation10 [shape = 'u8[16384]{0}', space=vmem, size = 0x4000, scoped, tag = 'input window, operand 1']
    #allocation11 [shape = 's32[2]{0}', space=sflag, size = 0x8, scoped, tag = 'scoped memory for tpu_custom_call.1']
    #allocation12 [shape = 'u8[8192]{0}', space=vmem, size = 0x2000, scoped, tag = 'output window, operand 0']
    %7 = vsyncpa [#allocation8], 0
    %s8 = scalar_lea.sflag [#allocation8], 1
    %9 = vsyncpa %s8, 0
    %10 = vsyncpa [#allocation11], 0
    %s11 = scalar_lea.sflag [#allocation11], 1
    %12 = vsyncpa %s11, 0
    %13 = vsyncpa [#allocation9], 0
    %s14 = scalar_lea.sflag [#allocation9], 1
    %15 = vsyncpa %s14, 0
    loop: start=0, step=1, limit=4
    $region2: #{tpu_custom_call.1} parent=1 // loop_pre_header
      _
    $region3: #{tpu_custom_call.1} parent=1 // loop_header
      %s17 = sphi 0, %s21
      %p18 = scmp.ge.s32.totalorder %s17, 4
      %s24 = sphi 0, %s36
      %s25 = sphi 0, %s32
      %s26 = sphi 0, %s24
      %s27 = sphi 0, %s25
      %s28 = sphi 0, %s26
      %s29 = sphi 0, %s27
      %s39 = sphi 0, %s41
      %s42 = sphi 0, %s39
      %s43 = sphi 0, %s42
      %s59 = sphi 0, %s43
      %s65 = sphi 0, %s67
      %s68 = sphi 0, %s65
      %s69 = sphi 0, %s68
      %s85 = sphi 0, %s69
      %s91 = sphi 0, %s93
      %s94 = sphi 0, %s91
      %s95 = sphi 0, %s94
      %s111 = sphi 0, %s95
    $region4: #{tpu_custom_call.1} parent=1 // loop_header_branch
      %20 = sbr.rel (%p18) target = $region8
    $region5: #{tpu_custom_call.1} parent=1 // loop_body
      %s22 = ssub.s32 %s17, 1
      %s23 = ssub.s32 %s17, 2
      %s30 = sadd.s32 1, %s25
      %p31 = scmp.ge.s32.totalorder %s30, 1
      %s32 = scalar_select %p31, 0, %s30
      %s33 = sadd.s32 1, %s24
      %s34 = scalar_select %p31, %s33, %s24
      %p35 = scmp.ge.s32.totalorder %s34, 2
      %s36 = scalar_select %p35, 0, %s34
      %s37 = ssub.s32 %s24, %s36
      %p38 = scmp.eq.s32.totalorder %s37, 0
      %s40 = sadd.s32 %s39, 1
      %s41 = scalar_select %p38, %s39, %s40
      %p44 = pneg %p38
      %p45 = scmp.eq.s32.totalorder %s17, 1
      %p46 = por %p44, %p45
      %p47 = scmp.ne.s32.totalorder %s39, %s42
      %p48 = scmp.eq.s32.totalorder %s17, 0
      %p49 = por %p47, %p48
      %p50 = scmp.ne.s32.totalorder %s39, %s42
      %p51 = scmp.eq.s32.totalorder %s22, 1
      %p52 = por %p50, %p51
      %p53 = scmp.ne.s32.totalorder %s42, %s43
      %p54 = scmp.eq.s32.totalorder %s22, 0
      %p55 = por %p53, %p54
      %p56 = scmp.ne.s32.totalorder %s42, %s43
      %p57 = scmp.eq.s32.totalorder %s23, 1
      %p58 = por %p56, %p57
      %p60 = scmp.ne.s32.totalorder %s43, %s59
      %p61 = scmp.eq.s32.totalorder %s23, 0
      %p62 = por %p60, %p61
      %s63 = ssub.s32 %s24, %s36
      %p64 = scmp.eq.s32.totalorder %s63, 0
      %s66 = sadd.s32 %s65, 1
      %s67 = scalar_select %p64, %s65, %s66
      %p70 = pneg %p64
      %p71 = scmp.eq.s32.totalorder %s17, 1
      %p72 = por %p70, %p71
      %p73 = scmp.ne.s32.totalorder %s65, %s68
      %p74 = scmp.eq.s32.totalorder %s17, 0
      %p75 = por %p73, %p74
      %p76 = scmp.ne.s32.totalorder %s65, %s68
      %p77 = scmp.eq.s32.totalorder %s22, 1
      %p78 = por %p76, %p77
      %p79 = scmp.ne.s32.totalorder %s68, %s69
      %p80 = scmp.eq.s32.totalorder %s22, 0
      %p81 = por %p79, %p80
      %p82 = scmp.ne.s32.totalorder %s68, %s69
      %p83 = scmp.eq.s32.totalorder %s23, 1
      %p84 = por %p82, %p83
      %p86 = scmp.ne.s32.totalorder %s69, %s85
      %p87 = scmp.eq.s32.totalorder %s23, 0
      %p88 = por %p86, %p87
      %s89 = ssub.s32 %s24, %s36
      %p90 = scmp.eq.s32.totalorder %s89, 0
      %s92 = sadd.s32 %s91, 1
      %s93 = scalar_select %p90, %s91, %s92
      %p96 = pneg %p90
      %p97 = scmp.eq.s32.totalorder %s17, 1
      %p98 = por %p96, %p97
      %p99 = scmp.ne.s32.totalorder %s91, %s94
      %p100 = scmp.eq.s32.totalorder %s17, 0
      %p101 = por %p99, %p100
      %p102 = scmp.ne.s32.totalorder %s91, %s94
      %p103 = scmp.eq.s32.totalorder %s22, 1
      %p104 = por %p102, %p103
      %p105 = scmp.ne.s32.totalorder %s94, %s95
      %p106 = scmp.eq.s32.totalorder %s22, 0
      %p107 = por %p105, %p106
      %p108 = scmp.ne.s32.totalorder %s94, %s95
      %p109 = scmp.eq.s32.totalorder %s23, 1
      %p110 = por %p108, %p109
      %p112 = scmp.ne.s32.totalorder %s95, %s111
      %p113 = scmp.eq.s32.totalorder %s23, 0
      %p114 = por %p112, %p113
      %p115 = scmp.le.s32.totalorder 1, %s17
      %p116 = scmp.lt.s32.totalorder %s17, 3
      %p117 = pnand %p115, %p116
      %p118 = pneg %p117
      // Predicated region
      $region9: #{tpu_custom_call.1} parent=5 // pred_check
        _
      $region10: #{tpu_custom_call.1} parent=5 // pred_check_branch
        %120 = sbr.rel (%p117) target = $region12
      $region11: #{tpu_custom_call.1} parent=5 // pred_region
        %s121 = ssub.s32 %s17, 1
      $region12: #{tpu_custom_call.1} parent=5 // pred_fallthru
        _
      %p122 = scmp.lt.s32.totalorder %s17, 2
      // Predicated region
      $region13: #{tpu_custom_call.1} parent=5 // pred_check
        %p123 = pneg %p122
      $region14: #{tpu_custom_call.1} parent=5 // pred_check_branch
        %125 = sbr.rel (%p123) target = $region16
      $region15: #{tpu_custom_call.1} parent=5 // pred_region
        // Predicated region
        $region17: #{tpu_custom_call.1} parent=15 // pred_check
          %p126 = pneg %p49
        $region18: #{tpu_custom_call.1} parent=15 // pred_check_branch
          %128 = sbr.rel (%p126) target = $region20
        $region19: #{tpu_custom_call.1} parent=15 // pred_region
          %s129 = sand.u32 %s39, 1
          %s130 = scalar_lea.sflag [#allocation8], %s129
          %s131 = sand.u32 %s39, 1
          %s132 = smul.addr %s131, 16
          %s133 = scalar_lea.vmem [#allocation7], %s132
          %135 = vsyncadd %s130, 0
          %s136 = smul.addr %s24, 2
          %s137 = smul.addr %s136, 8
          %s138 = scalar_lea.hbm %s0, %s137
          %s139 = sshll.u32 %s138, 4
          %s140 = int_to_ptr.hbm [resolvable:$true] %s139
          %s141 = sshll.u32 %s133, 4
          %s142 = int_to_ptr.vmem [resolvable:$true] %s141
          %147 = dma.hbm_to_vmem [thread:$0]  %s140, 256, %s142, %s130, 128, 128, 8
        $region20: #{tpu_custom_call.1} parent=15 // pred_fallthru
          _
        // Predicated region
        $region21: #{tpu_custom_call.1} parent=15 // pred_check
          %p148 = pneg %p75
        $region22: #{tpu_custom_call.1} parent=15 // pred_check_branch
          %150 = sbr.rel (%p148) target = $region24
        $region23: #{tpu_custom_call.1} parent=15 // pred_region
          %s151 = sand.u32 %s65, 1
          %s152 = scalar_lea.sflag [#allocation11], %s151
          %s153 = sand.u32 %s65, 1
          %s154 = smul.addr %s153, 16
          %s155 = scalar_lea.vmem [#allocation10], %s154
          %157 = vsyncadd %s152, 0
          %s158 = smul.addr %s24, 2
          %s159 = smul.addr %s158, 8
          %s160 = scalar_lea.hbm %s1, %s159
          %s161 = sshll.u32 %s160, 4
          %s162 = int_to_ptr.hbm [resolvable:$true] %s161
          %s163 = sshll.u32 %s155, 4
          %s164 = int_to_ptr.vmem [resolvable:$true] %s163
          %169 = dma.hbm_to_vmem [thread:$0]  %s162, 256, %s164, %s152, 128, 128, 8
        $region24: #{tpu_custom_call.1} parent=15 // pred_fallthru
          _
      $region16: #{tpu_custom_call.1} parent=5 // pred_fallthru
        _
      %p170 = scmp.le.s32.totalorder 1, %s17
      %p171 = scmp.lt.s32.totalorder %s17, 3
      %p172 = pnand %p170, %p171
      %p173 = pneg %p172
      // Predicated region
      $region25: #{tpu_custom_call.1} parent=5 // pred_check
        _
      $region26: #{tpu_custom_call.1} parent=5 // pred_check_branch
        %175 = sbr.rel (%p172) target = $region28
      $region27: #{tpu_custom_call.1} parent=5 // pred_region
        %s176 = ssub.s32 %s17, 1
        %s177 = sand.u32 %s42, 1
        %s178 = scalar_lea.sflag [#allocation8], %s177
        %s179 = sand.u32 %s42, 1
        %s180 = smul.addr %s179, 16
        %s181 = scalar_lea.vmem [#allocation7], %s180
        // Predicated region
        $region29: #{tpu_custom_call.1} parent=27 // pred_check
          %p182 = pneg %p55
        $region30: #{tpu_custom_call.1} parent=27 // pred_check_branch
          %184 = sbr.rel (%p182) target = $region32
        $region31: #{tpu_custom_call.1} parent=27 // pred_region
          %186 = dma.done %s178, 256
        $region32: #{tpu_custom_call.1} parent=27 // pred_fallthru
          _
        %s187 = sand.u32 %s68, 1
        %s188 = scalar_lea.sflag [#allocation11], %s187
        %s189 = sand.u32 %s68, 1
        %s190 = smul.addr %s189, 16
        %s191 = scalar_lea.vmem [#allocation10], %s190
        // Predicated region
        $region33: #{tpu_custom_call.1} parent=27 // pred_check
          %p192 = pneg %p81
        $region34: #{tpu_custom_call.1} parent=27 // pred_check_branch
          %194 = sbr.rel (%p192) target = $region36
        $region35: #{tpu_custom_call.1} parent=27 // pred_region
          %196 = dma.done %s188, 256
        $region36: #{tpu_custom_call.1} parent=27 // pred_fallthru
          _
        %s197 = sand.u32 %s42, 1
        %s198 = scalar_lea.sflag [#allocation8], %s197
        %s199 = sand.u32 %s42, 1
        %s200 = smul.addr %s199, 16
        %s201 = scalar_lea.vmem [#allocation7], %s200
        %p202 = pneg %p55
        %p203 = pneg %p52
        %s204 = sand.u32 %s68, 1
        %s205 = scalar_lea.sflag [#allocation11], %s204
        %s206 = sand.u32 %s68, 1
        %s207 = smul.addr %s206, 16
        %s208 = scalar_lea.vmem [#allocation10], %s207
        %p209 = pneg %p81
        %p210 = pneg %p78
        %p211 = pneg %p107
        %p212 = pneg %p104
        %s213 = sand.u32 %s94, 1
        %s214 = scalar_lea.sflag [#allocation9], %s213
        %s215 = sand.u32 %s94, 1
        %s216 = smul.addr %s215, 8
        %s217 = scalar_lea.vmem [#allocation12], %s216
        %p219 = scmp.eq.s32.totalorder %s27, 0
        // Predicated region
        $region37: #{tpu_custom_call.1} parent=27 // pred_check
          %p220 = pneg %p219
        $region38: #{tpu_custom_call.1} parent=27 // pred_check_branch
          %222 = sbr.rel (%p220) target = $region40
        $region39: #{tpu_custom_call.1} parent=27 // pred_region
          %v223 = vld [vmem:[%s181] sm:$0xff]
          %v224 = vld [vmem:[%s181 + $0x8] sm:$0xff]
          %v225 = vld [vmem:[%s191] sm:$0xff]
          %v226 = vld [vmem:[%s191 + $0x8] sm:$0xff]
          %v227 = vmul.f32 %v223, %v223
          %v228 = vmul.f32 %v224, %v224
          %vm229 = vcmask 261120
          %v230 = vsel %vm229, %v227, 0.0
          %231 = vadd.xlane.f32.xlu0 %v230
          %v232 = vpop.xlane.xlu0 %231
          %v233 = vsel %vm229, %v228, 0.0
          %234 = vadd.xlane.f32.xlu0 %v233
          %v235 = vpop.xlane.xlu0 %234
          %v238 = vlaneseq
          %v239 = vand.u32 %v238, 127
          %v240 = vperm.slane %v232, %v239
          %v241 = vperm.slane %v235, %v239
          %vm242 = vcmask 1041409
          %v243 = vsel %vm242, %v241, %v240
          %vm245 = vcmask 58368
          %246 = vst.msk [vmem:[#allocation2] sm:$0x3] %vm245, %v243
          %v247 = vmul.f32 %v225, %v225
          %v248 = vmul.f32 %v226, %v226
          %v249 = vsel %vm229, %v247, 0.0
          %250 = vadd.xlane.f32.xlu0 %v249
          %v251 = vpop.xlane.xlu0 %250
          %v252 = vsel %vm229, %v248, 0.0
          %253 = vadd.xlane.f32.xlu0 %v252
          %v254 = vpop.xlane.xlu0 %253
          %v257 = vperm.slane %v251, %v239
          %v258 = vperm.slane %v254, %v239
          %v259 = vsel %vm242, %v258, %v257
          %261 = vst.msk [vmem:[#allocation3] sm:$0x3] %vm245, %v259
          %vm262 = vcmask 9216
          %263 = vst.msk [vmem:[#allocation4] sm:$0x3] %vm262, 0.0
          %264 = vst.msk [vmem:[#allocation5] sm:$0x3] %vm262, 0.0
          %265 = vst [vmem:[#allocation6] sm:$0xff] 0.0
        $region40: #{tpu_custom_call.1} parent=27 // pred_fallthru
          _
        %s266 = smul.u32 %s27, 8
        %s267 = scalar_lea.vmem %s181, %s266 [#allocation7]
        %v268 = vld [vmem:[%s267] sm:$0xff]
        %v269 = vld [vmem:[%s267 + $0x8] sm:$0xff]
        %s270 = scalar_lea.vmem %s191, %s266 [#allocation10]
        %v271 = vld [vmem:[%s270] sm:$0xff]
        %v272 = vld [vmem:[%s270 + $0x8] sm:$0xff]
        %v273 = vmul.f32 %v268, %v268
        %v274 = vmul.f32 %v269, %v269
        %vm275 = vcmask 261120
        %v276 = vsel %vm275, %v273, 0.0
        %277 = vadd.xlane.f32.xlu0 %v276
        %v278 = vpop.xlane.xlu0 %277
        %v279 = vsel %vm275, %v274, 0.0
        %280 = vadd.xlane.f32.xlu0 %v279
        %v281 = vpop.xlane.xlu0 %280
        %v282 = vmul.f32 %v271, %v271
        %v283 = vmul.f32 %v272, %v272
        %v284 = vsel %vm275, %v282, 0.0
        %285 = vadd.xlane.f32.xlu0 %v284
        %v286 = vpop.xlane.xlu0 %285
        %v287 = vsel %vm275, %v283, 0.0
        %288 = vadd.xlane.f32.xlu0 %v287
        %v289 = vpop.xlane.xlu0 %288
        %v290 = vld [vmem:[#allocation2] sm:$0x3]
        %v291 = vld [vmem:[#allocation3] sm:$0x3]
        %v292 = vld [vmem:[%s181] sm:$0xff]
        %v293 = vld [vmem:[%s181 + $0x8] sm:$0xff]
        %v294 = vpack.c.bf16 %v292, %v292
        %v295 = vpack.c.bf16 %v293, %v293
        %v296 = vld [vmem:[%s191] sm:$0xff]
        %v297 = vld [vmem:[%s191 + $0x8] sm:$0xff]
        %v298 = vpack.c.bf16 %v296, %v296
        %v299 = vpack.c.bf16 %v297, %v297
        %v300 = vpack.c.bf16 %v268, %v268
        %v301 = vpack.c.bf16 %v269, %v269
        %v303 = vsel %vm275, %v300, 0
        %v306 = vsel %vm275, %v294, 0
        %308 = vmatpush.bf16.xpose.msra.mxu0 0
        %309 = vmatpush.bf16.xpose.msra.mxu0 0
        %310 = vmatpush.bf16.xpose.msra.mxu0 0
        %311 = vmatpush.bf16.xpose.msra.mxu0 0
        %312 = vmatpush.bf16.xpose.msra.mxu0 0
        %313 = vmatpush.bf16.xpose.msra.mxu0 0
        %314 = vmatpush.bf16.xpose.msra.mxu0 0
        %315 = vmatpush.bf16.xpose.msra.mxu0 %v306
        %316 = vmatmul.bf16.gmra.mxu0 %v303
        %v317 = vpop.f32.mrf.mxu0
        %v318 = vadd.f32 0.0, %v317
        %v319 = vpop.f32.mrf.mxu0
        %320 = vdwg.mxu0
        %v322 = vsel %vm275, %v301, 0
        %v325 = vsel %vm275, %v295, 0
        %327 = vmatpush.bf16.xpose.msra.mxu0 0
        %328 = vmatpush.bf16.xpose.msra.mxu0 0
        %329 = vmatpush.bf16.xpose.msra.mxu0 0
        %330 = vmatpush.bf16.xpose.msra.mxu0 0
        %331 = vmatpush.bf16.xpose.msra.mxu0 0
        %332 = vmatpush.bf16.xpose.msra.mxu0 0
        %333 = vmatpush.bf16.xpose.msra.mxu0 0
        %334 = vmatpush.bf16.xpose.msra.mxu0 %v325
        %335 = vmatmul.bf16.gmra.mxu0 %v322
        %v336 = vpop.f32.mrf.mxu0
        %v337 = vadd.f32 0.0, %v336
        %v338 = vpop.f32.mrf.mxu0
        %339 = vdwg.mxu0
        %v340 = vpack.c.bf16 %v271, %v271
        %v341 = vpack.c.bf16 %v272, %v272
        %v343 = vsel %vm275, %v340, 0
        %v346 = vsel %vm275, %v298, 0
        %348 = vmatpush.bf16.xpose.msra.mxu0 0
        %349 = vmatpush.bf16.xpose.msra.mxu0 0
        %350 = vmatpush.bf16.xpose.msra.mxu0 0
        %351 = vmatpush.bf16.xpose.msra.mxu0 0
        %352 = vmatpush.bf16.xpose.msra.mxu0 0
        %353 = vmatpush.bf16.xpose.msra.mxu0 0
        %354 = vmatpush.bf16.xpose.msra.mxu0 0
        %355 = vmatpush.bf16.xpose.msra.mxu0 %v346
        %356 = vmatmul.bf16.gmra.mxu0 %v343
        %v357 = vpop.f32.mrf.mxu0
        %v358 = vadd.f32 0.0, %v357
        %v359 = vpop.f32.mrf.mxu0
        %360 = vdwg.mxu0
        %v362 = vsel %vm275, %v341, 0
        %v365 = vsel %vm275, %v299, 0
        %367 = vmatpush.bf16.xpose.msra.mxu0 0
        %368 = vmatpush.bf16.xpose.msra.mxu0 0
        %369 = vmatpush.bf16.xpose.msra.mxu0 0
        %370 = vmatpush.bf16.xpose.msra.mxu0 0
        %371 = vmatpush.bf16.xpose.msra.mxu0 0
        %372 = vmatpush.bf16.xpose.msra.mxu0 0
        %373 = vmatpush.bf16.xpose.msra.mxu0 0
        %374 = vmatpush.bf16.xpose.msra.mxu0 %v365
        %375 = vmatmul.bf16.gmra.mxu0 %v362
        %v376 = vpop.f32.mrf.mxu0
        %v377 = vadd.f32 0.0, %v376
        %v378 = vpop.f32.mrf.mxu0
        %379 = vdwg.mxu0
        %v380 = vlaneseq
        %v381 = vshrl.u32 %v380, 7
        %v382 = vstv %s266
        %v383 = vadd.s32 %v382, %v381
        %v384 = vlaneseq
        %v385 = vand.u32 %v384, 127
        %vm386 = vcmp.ne.s32.totalorder %v383, %v385
        %v388 = vrot.slane %v290, 1
        %v389 = vperm.slane %v290, 0
        %v390 = vperm.slane %v388, 0
        %v393 = vadd.f32 %v278, %v389
        %v394 = vadd.f32 %v281, %v390
        %v395 = vmul.f32 %v318, 2.0
        %v396 = vmul.f32 %v337, 2.0
        %v397 = vsub.f32 %v393, %v395
        %v398 = vsub.f32 %v394, %v396
        %v399 = vmax.f32 %v397, 0.0
        %v400 = vmax.f32 %v398, 0.0
        %v401 = vadd.f32 %v399, 1e-08
        %v402 = vadd.f32 %v400, 1e-08
        %v403 = vrsqrt.pop %v401
        %v404 = vmul.f32 %v403, %v401
        %v405 = vmul.f32 %v404, %v403
        %v406 = vmul.f32 0.5, %v405
        %v407 = vsub.f32 1.5, %v406
        %v408 = vmul.f32 %v403, %v407
        %v409 = vmul.f32 %v401, %v408
        %vm410 = vcmp.eq.f32.partialorder %v401, inf
        %v411 = vsel %vm410, %v401, %v409
        %vm412 = vcmp.eq.f32.partialorder %v401, 0.0
        %v413 = vand.u32 %v401, 2147483648
        %v414 = vsel %vm412, %v413, %v411
        %v415 = vrsqrt.pop %v402
        %v416 = vmul.f32 %v415, %v402
        %v417 = vmul.f32 %v416, %v415
        %v418 = vmul.f32 0.5, %v417
        %v419 = vsub.f32 1.5, %v418
        %v420 = vmul.f32 %v415, %v419
        %v421 = vmul.f32 %v402, %v420
        %vm422 = vcmp.eq.f32.partialorder %v402, inf
        %v423 = vsel %vm422, %v402, %v421
        %vm424 = vcmp.eq.f32.partialorder %v402, 0.0
        %v425 = vand.u32 %v402, 2147483648
        %v426 = vsel %vm424, %v425, %v423
        %v428 = vrot.slane %v291, 1
        %v429 = vperm.slane %v291, 0
        %v430 = vperm.slane %v428, 0
        %v433 = vadd.f32 %v286, %v429
        %v434 = vadd.f32 %v289, %v430
        %v435 = vmul.f32 %v358, 2.0
        %v436 = vmul.f32 %v377, 2.0
        %v437 = vsub.f32 %v433, %v435
        %v438 = vsub.f32 %v434, %v436
        %v439 = vmax.f32 %v437, 0.0
        %v440 = vmax.f32 %v438, 0.0
        %v441 = vadd.f32 %v439, 1e-08
        %v442 = vadd.f32 %v440, 1e-08
        %v443 = vrsqrt.pop %v441
        %v444 = vmul.f32 %v443, %v441
        %v445 = vmul.f32 %v444, %v443
        %v446 = vmul.f32 0.5, %v445
        %v447 = vsub.f32 1.5, %v446
        %v448 = vmul.f32 %v443, %v447
        %v449 = vmul.f32 %v441, %v448
        %vm450 = vcmp.eq.f32.partialorder %v441, inf
        %v451 = vsel %vm450, %v441, %v449
        %vm452 = vcmp.eq.f32.partialorder %v441, 0.0
        %v453 = vand.u32 %v441, 2147483648
        %v454 = vsel %vm452, %v453, %v451
        %v455 = vrsqrt.pop %v442
        %v456 = vmul.f32 %v455, %v442
        %v457 = vmul.f32 %v456, %v455
        %v458 = vmul.f32 0.5, %v457
        %v459 = vsub.f32 1.5, %v458
        %v460 = vmul.f32 %v455, %v459
        %v461 = vmul.f32 %v442, %v460
        %vm462 = vcmp.eq.f32.partialorder %v442, inf
        %v463 = vsel %vm462, %v442, %v461
        %vm464 = vcmp.eq.f32.partialorder %v442, 0.0
        %v465 = vand.u32 %v442, 2147483648
        %v466 = vsel %vm464, %v465, %v463
        %v467 = vsub.f32 %v414, %v454
        %v468 = vsub.f32 %v426, %v466
        %v469 = vsel %vm386, 1, 0
        %vm470 = vcmp.eq.s32.totalorder %v469, 1
        %v471 = vsel %vm470, %v467, 0.0
        %v472 = vsel %vm470, %v468, 0.0
        %v473 = vmul.f32 %v471, %v471
        %v474 = vmul.f32 %v472, %v472
        %vm475 = vcmask 64512
        %v476 = vsel %vm475, %v473, 0.0
        %v477 = vsel %vm475, %v474, 0.0
        %v478 = vadd.f32 %v476, %v477
        %479 = vadd.xlane.f32.xlu0 %v478
        %v480 = vpop.xlane.xlu0 %479
        %v481 = vrot.slane %v480, 4
        %v482 = vadd.f32 %v480, %v481
        %v483 = vrot.slane %v482, 2
        %v484 = vadd.f32 %v482, %v483
        %v485 = vrot.slane %v484, 1
        %v486 = vadd.f32 %v484, %v485
        %s487 = vtos %v486
        %v488 = vmax.f32 %v278, 1e-24
        %v489 = vmax.f32 %v281, 1e-24
        %v490 = vrsqrt.pop %v488
        %v491 = vmul.f32 %v490, %v488
        %v492 = vmul.f32 %v491, %v490
        %v493 = vmul.f32 0.5, %v492
        %v494 = vsub.f32 1.5, %v493
        %v495 = vmul.f32 %v490, %v494
        %vm496 = vweird.f32 %v488
        %vm497 = vweird.f32 %v490
        %vm498 = vmor %vm496, %vm497
        %v499 = vsel %vm498, %v490, %v495
        %v500 = vrsqrt.pop %v489
        %v501 = vmul.f32 %v500, %v489
        %v502 = vmul.f32 %v501, %v500
        %v503 = vmul.f32 0.5, %v502
        %v504 = vsub.f32 1.5, %v503
        %v505 = vmul.f32 %v500, %v504
        %vm506 = vweird.f32 %v489
        %vm507 = vweird.f32 %v500
        %vm508 = vmor %vm506, %vm507
        %v509 = vsel %vm508, %v500, %v505
        %v510 = vmax.f32 %v290, 1e-24
        %v511 = vrsqrt.pop %v510
        %v512 = vmul.f32 %v511, %v510
        %v513 = vmul.f32 %v512, %v511
        %v514 = vmul.f32 0.5, %v513
        %v515 = vsub.f32 1.5, %v514
        %v516 = vmul.f32 %v511, %v515
        %vm517 = vweird.f32 %v510
        %vm518 = vweird.f32 %v511
        %vm519 = vmor %vm517, %vm518
        %v520 = vsel %vm519, %v511, %v516
        %v521 = vmax.f32 %v286, 1e-24
        %v522 = vmax.f32 %v289, 1e-24
        %v523 = vrsqrt.pop %v521
        %v524 = vmul.f32 %v523, %v521
        %v525 = vmul.f32 %v524, %v523
        %v526 = vmul.f32 0.5, %v525
        %v527 = vsub.f32 1.5, %v526
        %v528 = vmul.f32 %v523, %v527
        %vm529 = vweird.f32 %v521
        %vm530 = vweird.f32 %v523
        %vm531 = vmor %vm529, %vm530
        %v532 = vsel %vm531, %v523, %v528
        %v533 = vrsqrt.pop %v522
        %v534 = vmul.f32 %v533, %v522
        %v535 = vmul.f32 %v534, %v533
        %v536 = vmul.f32 0.5, %v535
        %v537 = vsub.f32 1.5, %v536
        %v538 = vmul.f32 %v533, %v537
        %vm539 = vweird.f32 %v522
        %vm540 = vweird.f32 %v533
        %vm541 = vmor %vm539, %vm540
        %v542 = vsel %vm541, %v533, %v538
        %v543 = vmax.f32 %v291, 1e-24
        %v544 = vrsqrt.pop %v543
        %v545 = vmul.f32 %v544, %v543
        %v546 = vmul.f32 %v545, %v544
        %v547 = vmul.f32 0.5, %v546
        %v548 = vsub.f32 1.5, %v547
        %v549 = vmul.f32 %v544, %v548
        %vm550 = vweird.f32 %v543
        %vm551 = vweird.f32 %v544
        %vm552 = vmor %vm550, %vm551
        %v553 = vsel %vm552, %v544, %v549
        %v554 = vmul.f32 %v318, %v499
        %v555 = vmul.f32 %v337, %v509
        %v557 = vrot.slane %v520, 1
        %v558 = vperm.slane %v520, 0
        %v559 = vperm.slane %v557, 0
        %v562 = vmul.f32 %v554, %v558
        %v563 = vmul.f32 %v555, %v559
        %v564 = vmul.f32 %v358, %v532
        %v565 = vmul.f32 %v377, %v542
        %v567 = vrot.slane %v553, 1
        %v568 = vperm.slane %v553, 0
        %v569 = vperm.slane %v567, 0
        %v572 = vmul.f32 %v564, %v568
        %v573 = vmul.f32 %v565, %v569
        %v574 = vsub.f32 %v562, %v572
        %v575 = vsub.f32 %v563, %v573
        %v576 = vsel %vm470, %v574, 0.0
        %v577 = vsel %vm470, %v575, 0.0
        %v578 = vmul.f32 %v576, %v576
        %v579 = vmul.f32 %v577, %v577
        %v580 = vsel %vm475, %v578, 0.0
        %v581 = vsel %vm475, %v579, 0.0
        %v582 = vadd.f32 %v580, %v581
        %583 = vadd.xlane.f32.xlu0 %v582
        %v584 = vpop.xlane.xlu0 %583
        %v585 = vrot.slane %v584, 4
        %v586 = vadd.f32 %v584, %v585
        %v587 = vrot.slane %v586, 2
        %v588 = vadd.f32 %v586, %v587
        %v589 = vrot.slane %v588, 1
        %v590 = vadd.f32 %v588, %v589
        %s591 = vtos %v590
        %v592 = vsub.f32 %v268, %v271
        %v593 = vsub.f32 %v269, %v272
        %v594 = vmul.f32 %v592, %v592
        %v595 = vmul.f32 %v593, %v593
        %v596 = vsel %vm275, %v594, 0.0
        %v597 = vsel %vm275, %v595, 0.0
        %v598 = vadd.f32 %v596, %v597
        %599 = vadd.xlane.f32.xlu0 %v598
        %v600 = vpop.xlane.xlu0 %599
        %v601 = vrot.slane %v600, 4
        %v602 = vadd.f32 %v600, %v601
        %v603 = vrot.slane %v602, 2
        %v604 = vadd.f32 %v602, %v603
        %v605 = vrot.slane %v604, 1
        %v606 = vadd.f32 %v604, %v605
        %s607 = vtos %v606
        %v608 = vmul.f32 %v268, %v271
        %v609 = vmul.f32 %v269, %v272
        %v610 = vsel %vm275, %v608, 0.0
        %v611 = vsel %vm275, %v609, 0.0
        %v612 = vadd.f32 %v610, %v611
        %613 = vadd.xlane.f32.xlu0 %v612
        %v614 = vpop.xlane.xlu0 %613
        %v615 = vrot.slane %v614, 4
        %v616 = vadd.f32 %v614, %v615
        %v617 = vrot.slane %v616, 2
        %v618 = vadd.f32 %v616, %v617
        %v619 = vrot.slane %v618, 1
        %v620 = vadd.f32 %v618, %v619
        %s621 = vtos %v620
        %v622 = vmul.f32 %v269, %v268
        %v623 = vsel %vm275, %v622, 0.0
        %624 = vadd.xlane.f32.xlu0 %v623
        %v625 = vpop.xlane.xlu0 %624
        %v628 = vperm.slane %v278, %v385
        %v629 = vperm.slane %v625, %v385
        %vm630 = vcmask 1041409
        %v631 = vsel %vm630, %v629, %v628
        %vm633 = vcmask 58368
        %v634 = vsel %vm633, %v631, 0.0
        %635 = vadd.xlane.f32.xlu0 %v634
        %v636 = vpop.xlane.xlu0 %635
        %v637 = vmul.f32 %v272, %v271
        %v638 = vsel %vm275, %v637, 0.0
        %639 = vadd.xlane.f32.xlu0 %v638
        %v640 = vpop.xlane.xlu0 %639
        %v643 = vperm.slane %v286, %v385
        %v644 = vperm.slane %v640, %v385
        %v645 = vsel %vm630, %v644, %v643
        %v647 = vsel %vm633, %v645, 0.0
        %648 = vadd.xlane.f32.xlu0 %v647
        %v649 = vpop.xlane.xlu0 %648
        %vm650 = vcmp.eq.s32.totalorder %v385, 0
        %v651 = vsel %vm650, %v636, 0.0
        %v652 = vsel %vm650, %v649, 0.0
        %v654 = vperm.slane %v281, %v385
        %v655 = vsel %vm630, %v654, %v629
        %v657 = vsel %vm633, %v655, 0.0
        %658 = vadd.xlane.f32.xlu0 %v657
        %v659 = vpop.xlane.xlu0 %658
        %v661 = vperm.slane %v289, %v385
        %v662 = vsel %vm630, %v661, %v644
        %v664 = vsel %vm633, %v662, 0.0
        %665 = vadd.xlane.f32.xlu0 %v664
        %v666 = vpop.xlane.xlu0 %665
        %vm667 = vcmp.eq.s32.totalorder %v385, 1
        %v668 = vsel %vm667, %v659, %v651
        %v669 = vsel %vm667, %v666, %v652
        %v670 = vld [vmem:[#allocation4] sm:$0x3]
        %v671 = vadd.f32 %v670, %v668
        %vm672 = vcmask 9216
        %673 = vst.msk [vmem:[#allocation4] sm:$0x3] %vm672, %v671
        %v674 = vld [vmem:[#allocation5] sm:$0x3]
        %v675 = vadd.f32 %v674, %v669
        %676 = vst.msk [vmem:[#allocation5] sm:$0x3] %vm672, %v675
        %vm677 = vcmp.eq.s32.totalorder %v381, 0
        %vm678 = vmand %vm677, %vm650
        %v679 = vstv %s487
        %v680 = vsel %vm678, %v679, 0.0
        %vm681 = vmand %vm677, %vm667
        %v682 = vstv %s591
        %v683 = vsel %vm681, %v682, %v680
        %vm684 = vcmp.eq.s32.totalorder %v385, 2
        %vm685 = vmand %vm677, %vm684
        %v686 = vstv %s607
        %v687 = vsel %vm685, %v686, %v683
        %vm688 = vcmp.eq.s32.totalorder %v385, 3
        %vm689 = vmand %vm677, %vm688
        %v690 = vstv %s621
        %v691 = vsel %vm689, %v690, %v687
        %v692 = vld [vmem:[#allocation6] sm:$0xff]
        %v693 = vadd.f32 %v692, %v691
        %694 = vst [vmem:[#allocation6] sm:$0xff] %v693
        // Predicated region
        $region41: #{tpu_custom_call.1} parent=27 // pred_check
          %p695 = pneg %p219
        $region42: #{tpu_custom_call.1} parent=27 // pred_check_branch
          %697 = sbr.rel (%p695) target = $region44
        $region43: #{tpu_custom_call.1} parent=27 // pred_region
          %v698 = vld [vmem:[#allocation6] sm:$0xff]
          %v699 = vsel %vm678, %v698, 0.0
          %700 = vadd.xlane.f32.xlu0 %v699
          %v701 = vpop.xlane.xlu0 %700
          %v702 = vrot.slane %v701, 4
          %v703 = vadd.f32 %v701, %v702
          %v704 = vrot.slane %v703, 2
          %v705 = vadd.f32 %v703, %v704
          %v706 = vrot.slane %v705, 1
          %v707 = vadd.f32 %v705, %v706
          %s708 = vtos %v707
          %v709 = vsel %vm681, %v698, 0.0
          %710 = vadd.xlane.f32.xlu0 %v709
          %v711 = vpop.xlane.xlu0 %710
          %v712 = vrot.slane %v711, 4
          %v713 = vadd.f32 %v711, %v712
          %v714 = vrot.slane %v713, 2
          %v715 = vadd.f32 %v713, %v714
          %v716 = vrot.slane %v715, 1
          %v717 = vadd.f32 %v715, %v716
          %s718 = vtos %v717
          %v719 = vsel %vm685, %v698, 0.0
          %720 = vadd.xlane.f32.xlu0 %v719
          %v721 = vpop.xlane.xlu0 %720
          %v722 = vrot.slane %v721, 4
          %v723 = vadd.f32 %v721, %v722
          %v724 = vrot.slane %v723, 2
          %v725 = vadd.f32 %v723, %v724
          %v726 = vrot.slane %v725, 1
          %v727 = vadd.f32 %v725, %v726
          %s728 = vtos %v727
          %v729 = vsel %vm689, %v698, 0.0
          %730 = vadd.xlane.f32.xlu0 %v729
          %v731 = vpop.xlane.xlu0 %730
          %v732 = vrot.slane %v731, 4
          %v733 = vadd.f32 %v731, %v732
          %v734 = vrot.slane %v733, 2
          %v735 = vadd.f32 %v733, %v734
          %v736 = vrot.slane %v735, 1
          %v737 = vadd.f32 %v735, %v736
          %s738 = vtos %v737
          %v739 = vrcp.pop 128.0
          %v740 = vmul.f32 128.0, %v739
          %v741 = vsub.f32 1.0, %v740
          %v742 = vmul.f32 %v739, %v741
          %v743 = vadd.f32 %v739, %v742
          %vm744 = vweird.f32 %v739
          %v745 = vsel %vm744, %v739, %v743
          %s746 = vtos %v745
          %s747 = smul.f32 %s708, %s746
          %v748 = vrcp.pop 128.0
          %v749 = vmul.f32 128.0, %v748
          %v750 = vsub.f32 1.0, %v749
          %v751 = vmul.f32 %v748, %v750
          %v752 = vadd.f32 %v748, %v751
          %vm753 = vweird.f32 %v748
          %v754 = vsel %vm753, %v748, %v752
          %s755 = vtos %v754
          %s756 = smul.f32 %s718, %s755
          %v757 = vrcp.pop 512.0
          %v758 = vmul.f32 512.0, %v757
          %v759 = vsub.f32 1.0, %v758
          %v760 = vmul.f32 %v757, %v759
          %v761 = vadd.f32 %v757, %v760
          %vm762 = vweird.f32 %v757
          %v763 = vsel %vm762, %v757, %v761
          %s764 = vtos %v763
          %s765 = smul.f32 %s728, %s764
          %v766 = vld [vmem:[#allocation2] sm:$0x3]
          %v767 = vsel %vm633, %v766, 0.0
          %768 = vadd.xlane.f32.xlu0 %v767
          %v769 = vpop.xlane.xlu0 %768
          %v770 = vrot.slane %v769, 4
          %v771 = vadd.f32 %v769, %v770
          %v772 = vrot.slane %v771, 2
          %v773 = vadd.f32 %v771, %v772
          %v774 = vrot.slane %v773, 1
          %v775 = vadd.f32 %v773, %v774
          %s776 = vtos %v775
          %v777 = vld [vmem:[#allocation3] sm:$0x3]
          %v778 = vsel %vm633, %v777, 0.0
          %779 = vadd.xlane.f32.xlu0 %v778
          %v780 = vpop.xlane.xlu0 %779
          %v781 = vrot.slane %v780, 4
          %v782 = vadd.f32 %v780, %v781
          %v783 = vrot.slane %v782, 2
          %v784 = vadd.f32 %v782, %v783
          %v785 = vrot.slane %v784, 1
          %v786 = vadd.f32 %v784, %v785
          %s787 = vtos %v786
          %v788 = vstv %s776
          %v789 = vrsqrt.pop %v788
          %v790 = vmul.f32 %v789, %v788
          %v791 = vmul.f32 %v790, %v789
          %v792 = vmul.f32 0.5, %v791
          %v793 = vsub.f32 1.5, %v792
          %v794 = vmul.f32 %v789, %v793
          %v795 = vmul.f32 %v788, %v794
          %vm796 = vcmp.eq.f32.partialorder %v788, inf
          %v797 = vsel %vm796, %v788, %v795
          %vm798 = vcmp.eq.f32.partialorder %v788, 0.0
          %v799 = vand.u32 %v788, 2147483648
          %v800 = vsel %vm798, %v799, %v797
          %s801 = vtos %v800
          %v802 = vstv %s787
          %v803 = vrsqrt.pop %v802
          %v804 = vmul.f32 %v803, %v802
          %v805 = vmul.f32 %v804, %v803
          %v806 = vmul.f32 0.5, %v805
          %v807 = vsub.f32 1.5, %v806
          %v808 = vmul.f32 %v803, %v807
          %v809 = vmul.f32 %v802, %v808
          %vm810 = vcmp.eq.f32.partialorder %v802, inf
          %v811 = vsel %vm810, %v802, %v809
          %vm812 = vcmp.eq.f32.partialorder %v802, 0.0
          %v813 = vand.u32 %v802, 2147483648
          %v814 = vsel %vm812, %v813, %v811
          %s815 = vtos %v814
          %s816 = smul.f32 %s801, %s815
          %s817 = smax.f32 %s816, 1e-08
          %v818 = vstv %s817
          %v819 = vrcp.pop %v818
          %v820 = vmul.f32 %v818, %v819
          %v821 = vsub.f32 1.0, %v820
          %v822 = vmul.f32 %v819, %v821
          %v823 = vadd.f32 %v819, %v822
          %vm824 = vweird.f32 %v818
          %vm825 = vweird.f32 %v819
          %vm826 = vmor %vm824, %vm825
          %v827 = vsel %vm826, %v819, %v823
          %v828 = vand.u32 2147483647, %v818
          %vm829 = vcmp.eq.f32.partialorder %v828, 8.507059e+37
          %v830 = vand.u32 %v818, 2147483648
          %v831 = vor.u32 1.1754944e-38, %v830
          %v832 = vsel %vm829, %v831, %v827
          %s833 = vtos %v832
          %s834 = smul.f32 %s738, %s833
          %s835 = sand.u32 2147483647, %s834
          %v836 = vstv %s835
          %v837 = vlog2.pop %v836
          %v838 = vmul.f32 %v837, 0.6931472
          %s839 = vtos %v838
          %s840 = ssub.f32 0.0, %s839
          %v841 = vld [vmem:[#allocation4] sm:$0x3]
          %v842 = vld [vmem:[#allocation5] sm:$0x3]
          %vm843 = vcmp.eq.s32.totalorder %v381, %v385
          %v844 = vsel %vm843, %v841, 0.0
          %v845 = vsel %vm672, %v844, 0.0
          %846 = vadd.xlane.f32.xlu0 %v845
          %v847 = vpop.xlane.xlu0 %846
          %v848 = vrot.slane %v845, 4
          %v849 = vadd.f32 %v845, %v848
          %v850 = vrot.slane %v849, 2
          %v851 = vadd.f32 %v849, %v850
          %v852 = vrot.slane %v851, 1
          %v853 = vadd.f32 %v851, %v852
          %v854 = vsel %vm843, %v842, 0.0
          %v855 = vsel %vm672, %v854, 0.0
          %856 = vadd.xlane.f32.xlu0 %v855
          %v857 = vpop.xlane.xlu0 %856
          %v858 = vrot.slane %v855, 4
          %v859 = vadd.f32 %v855, %v858
          %v860 = vrot.slane %v859, 2
          %v861 = vadd.f32 %v859, %v860
          %v862 = vrot.slane %v861, 1
          %v863 = vadd.f32 %v861, %v862
          %v864 = vadd.f32 %v847, %v853
          %v865 = vmul.f32 %v841, 2.0
          %v866 = vsub.f32 %v864, %v865
          %v867 = vmax.f32 %v866, 0.0
          %v868 = vadd.f32 %v867, 1e-08
          %v869 = vrsqrt.pop %v868
          %v870 = vmul.f32 %v869, %v868
          %v871 = vmul.f32 %v870, %v869
          %v872 = vmul.f32 0.5, %v871
          %v873 = vsub.f32 1.5, %v872
          %v874 = vmul.f32 %v869, %v873
          %v875 = vmul.f32 %v868, %v874
          %vm876 = vcmp.eq.f32.partialorder %v868, inf
          %v877 = vsel %vm876, %v868, %v875
          %vm878 = vcmp.eq.f32.partialorder %v868, 0.0
          %v879 = vand.u32 %v868, 2147483648
          %v880 = vsel %vm878, %v879, %v877
          %v881 = vadd.f32 %v857, %v863
          %v882 = vmul.f32 %v842, 2.0
          %v883 = vsub.f32 %v881, %v882
          %v884 = vmax.f32 %v883, 0.0
          %v885 = vadd.f32 %v884, 1e-08
          %v886 = vrsqrt.pop %v885
          %v887 = vmul.f32 %v886, %v885
          %v888 = vmul.f32 %v887, %v886
          %v889 = vmul.f32 0.5, %v888
          %v890 = vsub.f32 1.5, %v889
          %v891 = vmul.f32 %v886, %v890
          %v892 = vmul.f32 %v885, %v891
          %vm893 = vcmp.eq.f32.partialorder %v885, inf
          %v894 = vsel %vm893, %v885, %v892
          %vm895 = vcmp.eq.f32.partialorder %v885, 0.0
          %v896 = vand.u32 %v885, 2147483648
          %v897 = vsel %vm895, %v896, %v894
          %v898 = vsub.f32 %v880, %v897
          %v899 = vsel %vm843, 0.0, %v898
          %v900 = vmul.f32 %v899, %v899
          %v901 = vsel %vm672, %v900, 0.0
          %902 = vadd.xlane.f32.xlu0 %v901
          %v903 = vpop.xlane.xlu0 %902
          %v904 = vrot.slane %v903, 4
          %v905 = vadd.f32 %v903, %v904
          %v906 = vrot.slane %v905, 2
          %v907 = vadd.f32 %v905, %v906
          %v908 = vrot.slane %v907, 1
          %v909 = vadd.f32 %v907, %v908
          %s910 = vtos %v909
          %v911 = vrcp.pop 4.0
          %v912 = vmul.f32 4.0, %v911
          %v913 = vsub.f32 1.0, %v912
          %v914 = vmul.f32 %v911, %v913
          %v915 = vadd.f32 %v911, %v914
          %vm916 = vweird.f32 %v911
          %v917 = vsel %vm916, %v911, %v915
          %s918 = vtos %v917
          %s919 = smul.f32 %s910, %s918
          %v920 = vmax.f32 %v847, 1e-24
          %v921 = vrsqrt.pop %v920
          %v922 = vmul.f32 %v921, %v920
          %v923 = vmul.f32 %v922, %v921
          %v924 = vmul.f32 0.5, %v923
          %v925 = vsub.f32 1.5, %v924
          %v926 = vmul.f32 %v921, %v925
          %vm927 = vweird.f32 %v920
          %vm928 = vweird.f32 %v921
          %vm929 = vmor %vm927, %vm928
          %v930 = vsel %vm929, %v921, %v926
          %v931 = vmul.f32 %v841, %v930
          %v932 = vmax.f32 %v853, 1e-24
          %v933 = vrsqrt.pop %v932
          %v934 = vmul.f32 %v933, %v932
          %v935 = vmul.f32 %v934, %v933
          %v936 = vmul.f32 0.5, %v935
          %v937 = vsub.f32 1.5, %v936
          %v938 = vmul.f32 %v933, %v937
          %vm939 = vweird.f32 %v932
          %vm940 = vweird.f32 %v933
          %vm941 = vmor %vm939, %vm940
          %v942 = vsel %vm941, %v933, %v938
          %v943 = vmul.f32 %v931, %v942
          %v944 = vmax.f32 %v857, 1e-24
          %v945 = vrsqrt.pop %v944
          %v946 = vmul.f32 %v945, %v944
          %v947 = vmul.f32 %v946, %v945
          %v948 = vmul.f32 0.5, %v947
          %v949 = vsub.f32 1.5, %v948
          %v950 = vmul.f32 %v945, %v949
          %vm951 = vweird.f32 %v944
          %vm952 = vweird.f32 %v945
          %vm953 = vmor %vm951, %vm952
          %v954 = vsel %vm953, %v945, %v950
          %v955 = vmul.f32 %v842, %v954
          %v956 = vmax.f32 %v863, 1e-24
          %v957 = vrsqrt.pop %v956
          %v958 = vmul.f32 %v957, %v956
          %v959 = vmul.f32 %v958, %v957
          %v960 = vmul.f32 0.5, %v959
          %v961 = vsub.f32 1.5, %v960
          %v962 = vmul.f32 %v957, %v961
          %vm963 = vweird.f32 %v956
          %vm964 = vweird.f32 %v957
          %vm965 = vmor %vm963, %vm964
          %v966 = vsel %vm965, %v957, %v962
          %v967 = vmul.f32 %v955, %v966
          %v968 = vsub.f32 %v943, %v967
          %v969 = vsel %vm843, 0.0, %v968
          %v970 = vmul.f32 %v969, %v969
          %v971 = vsel %vm672, %v970, 0.0
          %972 = vadd.xlane.f32.xlu0 %v971
          %v973 = vpop.xlane.xlu0 %972
          %v974 = vrot.slane %v973, 4
          %v975 = vadd.f32 %v973, %v974
          %v976 = vrot.slane %v975, 2
          %v977 = vadd.f32 %v975, %v976
          %v978 = vrot.slane %v977, 1
          %v979 = vadd.f32 %v977, %v978
          %s980 = vtos %v979
          %v981 = vrcp.pop 4.0
          %v982 = vmul.f32 4.0, %v981
          %v983 = vsub.f32 1.0, %v982
          %v984 = vmul.f32 %v981, %v983
          %v985 = vadd.f32 %v981, %v984
          %vm986 = vweird.f32 %v981
          %v987 = vsel %vm986, %v981, %v985
          %s988 = vtos %v987
          %s989 = smul.f32 %s980, %s988
          %v990 = vstv %s747
          %v991 = vsel %vm678, %v990, 0.0
          %v992 = vstv %s756
          %v993 = vsel %vm681, %v992, %v991
          %v994 = vstv %s765
          %v995 = vsel %vm685, %v994, %v993
          %v996 = vstv %s840
          %v997 = vsel %vm689, %v996, %v995
          %vm998 = vcmp.eq.s32.totalorder %v385, 4
          %vm999 = vmand %vm677, %vm998
          %v1000 = vstv %s919
          %v1001 = vsel %vm999, %v1000, %v997
          %vm1002 = vcmp.eq.s32.totalorder %v385, 5
          %vm1003 = vmand %vm677, %vm1002
          %v1004 = vstv %s989
          %v1005 = vsel %vm1003, %v1004, %v1001
          %1006 = vst [vmem:[%s217] sm:$0xff] %v1005
        $region44: #{tpu_custom_call.1} parent=27 // pred_fallthru
          _
        %s1007 = sand.u32 %s94, 1
        %s1008 = scalar_lea.sflag [#allocation9], %s1007
        %s1009 = sand.u32 %s94, 1
        %s1010 = smul.addr %s1009, 8
        %s1011 = scalar_lea.vmem [#allocation12], %s1010
        // Predicated region
        $region45: #{tpu_custom_call.1} parent=27 // pred_check
          %p1012 = pneg %p104
        $region46: #{tpu_custom_call.1} parent=27 // pred_check_branch
          %1014 = sbr.rel (%p1012) target = $region48
        $region47: #{tpu_custom_call.1} parent=27 // pred_region
          %1016 = vsyncadd %s1008, 0
          %s1017 = smul.addr %s26, 8
          %s1018 = scalar_lea.hbm %s2, %s1017
          %s1020 = sshll.u32 %s1011, 4
          %s1021 = int_to_ptr.vmem [resolvable:$true] %s1020
          %s1022 = sshll.u32 %s1018, 4
          %s1023 = int_to_ptr.hbm [resolvable:$true] %s1022
          %1025 = dma.vmem_to_hbm [thread:$0]  %s1021, 128, %s1023, %s1008
        $region48: #{tpu_custom_call.1} parent=27 // pred_fallthru
          _
      $region28: #{tpu_custom_call.1} parent=5 // pred_fallthru
        _
      %p1026 = scmp.le.s32.totalorder 2, %s17
      // Predicated region
      $region49: #{tpu_custom_call.1} parent=5 // pred_check
        %p1027 = pneg %p1026
      $region50: #{tpu_custom_call.1} parent=5 // pred_check_branch
        %1029 = sbr.rel (%p1027) target = $region52
      $region51: #{tpu_custom_call.1} parent=5 // pred_region
        %s1030 = ssub.s32 %s17, 2
        // Predicated region
        $region53: #{tpu_custom_call.1} parent=51 // pred_check
          %p1031 = pneg %p110
        $region54: #{tpu_custom_call.1} parent=51 // pred_check_branch
          %1033 = sbr.rel (%p1031) target = $region56
        $region55: #{tpu_custom_call.1} parent=51 // pred_region
          %s1034 = sand.u32 %s95, 1
          %s1035 = scalar_lea.sflag [#allocation9], %s1034
          %s1036 = sand.u32 %s95, 1
          %s1037 = smul.addr %s1036, 8
          %s1038 = scalar_lea.vmem [#allocation12], %s1037
          %1040 = dma.done %s1035, 128
        $region56: #{tpu_custom_call.1} parent=51 // pred_fallthru
          _
      $region52: #{tpu_custom_call.1} parent=5 // pred_fallthru
        _
    $region6: #{tpu_custom_call.1} parent=1 // loop_footer
      %s21 = sadd.s32 1, %s17
    $region7: #{tpu_custom_call.1} parent=1 // loop_footer_branch
      %16 = sbr.rel target = $region3
    $region8: #{tpu_custom_call.1} parent=1 // loop_exit
      _
    %1041 = vsyncpa [#allocation8], 1
    %s1042 = scalar_lea.sflag [#allocation8], 1
    %1043 = vsyncpa %s1042, 1
    %1044 = vsyncpa [#allocation11], 1
    %s1045 = scalar_lea.sflag [#allocation11], 1
    %1046 = vsyncpa %s1045, 1
    %1047 = vsyncpa [#allocation9], 1
    %s1048 = scalar_lea.sflag [#allocation9], 1
    %1049 = vsyncpa %s1048, 1

</llo_original>
